<compile_context>
chip_gen: v6e
topology: v6e:2x2x1
jax: 0.10.0
libtpu: 0.0.40
codegen_flags: <defaults>
</compile_context>

<pallas_src>
import functools

import jax
import jax.numpy as jnp
import numpy as np
from jax.experimental import pallas as pl
from jax.experimental.pallas import tpu as pltpu


def semantic_fmri_kernel(img_ref, fwd_ref, w1_ref, w3_ref, b3_ref, wa_ref, ba_ref,
                         graph_ref, coef_ref, *, elem_dtype):
    """One grid step == BB batch elements.

    img_ref:   (BB, T, V)    fMRI feature-map block (compute dtype, e.g. bf16)
    fwd_ref:   (C, D)        precomputed fc_2_f(word_features), f32 (invariant)
    w1_ref:    (V, D)        fc_1_f weight (pre-transposed, no bias)
    w3_ref:    (D, D)        fc_3_f weight (pre-transposed)
    b3_ref:    (1, D)        fc_3_f bias, f32
    wa_ref:    (D, V)        fc_a_f weight (pre-transposed)
    ba_ref:    (1, V)        fc_a_f bias, f32
    graph_ref: (BB, C, V)    output: graph_net_input block
    coef_ref:  (BB, T, C, V) output: softmax coefficients block
    """
    BB, T, V = img_ref.shape
    C, D = fwd_ref.shape

    # fc_1_f on the MXU: (BB*T, V) @ (V, D) -> f32 accumulate.
    img2d = img_ref[...].reshape(BB * T, V)
    fwh = jnp.dot(img2d, w1_ref[...], preferred_element_type=jnp.float32)   # (BB*T, D)
    fwd = fwd_ref[...]                                                      # (C, D) f32

    # Broadcasted product + tanh.  elem_dtype == bf16 on v6e/v7x (bf16 VPU/EUP):
    # the tanh output feeds the MXU as bf16 anyway, so this halves the binding
    # EUP/VPU work and removes a full-tensor pack/cast.  f32 on v5e.
    fwh_e = fwh.astype(elem_dtype)
    fwd_e = fwd.astype(elem_dtype)
    h = jnp.tanh(fwh_e[:, None, :] * fwd_e[None, :, :])                     # (BB*T, C, D)
    h = h.reshape(BB * T * C, D).astype(w3_ref.dtype)

    # fc_3_f: (BB*T*C, D) @ (D, D), f32 accumulate.
    lb = jnp.dot(h, w3_ref[...],
                 preferred_element_type=jnp.float32) + b3_ref[...]          # (BB*T*C, D)

    # fc_a_f -> softmax logits: (BB*T*C, D) @ (D, V).
    logits = jnp.dot(lb.astype(wa_ref.dtype), wa_ref[...],
                     preferred_element_type=jnp.float32) + ba_ref[...]      # (BB*T*C, V)

    # Softmax over the timepoint axis in (BB, T, C, V) layout: V stays lane-dense,
    # the reshape only splits leading/sublane dims (no lane relayout).
    logits4 = logits.reshape(BB, T, C, V)
    m = jnp.max(logits4, axis=1, keepdims=True)                             # (BB, 1, C, V)
    e = jnp.exp(logits4 - m)
    s = jnp.sum(e, axis=1, keepdims=True)
    coef = e * pl.reciprocal(s, approx=True)                                # EUP vrcp

    # graph_net_input: sum over T of lb (viewed as (BB, T, C, V); valid since D == V)
    # weighted by the softmax coefficients (f32 accumulation, f32 store).
    lb4 = lb.reshape(BB, T, C, V)
    graph_ref[...] = jnp.sum(lb4 * coef, axis=1).astype(graph_ref.dtype)    # (BB, C, V)
    coef_ref[...] = coef.astype(coef_ref.dtype)


# ----------------------------------------------------------------------------
# Generation-aware sizing helpers.
# ----------------------------------------------------------------------------
def _tpu_generation():
    try:
        kind = jax.devices()[0].device_kind.lower()
    except Exception:
        return 6
    for pat, gen in (("v7", 7), ("7x", 7), ("v6", 6), ("v5", 5), ("v4", 4), ("v3", 3)):
        if pat in kind:
            return gen
    return 6


def _vmem_capacity_bytes(gen):
    try:
        return int(pltpu.get_tpu_info().vmem_capacity_bytes)
    except Exception:
        # v7x has 64 MiB per TensorCore; v5e/v6e have 128 MiB.
        return (64 if gen >= 7 else 128) << 20


def _block_vmem_bytes(BB, T, C, V, D, elem_isz, coef_isz, single_buffer_weights):
    """Per-grid-step VMEM footprint estimate (pipelined buffers + intermediates)."""
    rows_bt = BB * T
    rows = BB * T * C
    # Pipelined (double-buffered) blocks: img input + two output blocks.
    pipelined = (2 * rows_bt * V * elem_isz
                 + 2 * BB * C * V * 4
                 + 2 * rows * V * coef_isz)
    # Grid-invariant operands: counted once when single-buffered, twice otherwise.
    wfac = 1 if single_buffer_weights else 2
    weights = wfac * (C * D * 4 + V * D * elem_isz + D * D * elem_isz
                      + D * V * elem_isz + D * 4 + V * 4)
    # Major intermediates: fwh (f32), h (elem), lb (f32), logits/e/coef (f32).
    inter = (rows_bt * D * 4 + rows * D * elem_isz + rows * D * 4 + 3 * rows * V * 4)
    return pipelined + weights + 2 * inter  # 2x headroom for fusion temporaries


def _pick_block_batch(B, T, C, footprint, vmem_budget, min_grid_steps=1):
    """Largest divisor BB of B whose per-step footprint fits the VMEM budget.

    Prefers BB*T*C a multiple of 8 (f32 sublane) and, on v7x, keeps at least
    `min_grid_steps` grid steps so the parallel axis can span both TensorCores.
    """
    divisors = [bb for bb in range(1, B + 1) if B % bb == 0]
    feasible = [bb for bb in divisors if footprint(bb) <= vmem_budget] or [1]
    if min_grid_steps > 1:
        split = [bb for bb in feasible if B // bb >= min_grid_steps]
        if split:
            feasible = split
    aligned = [bb for bb in feasible if (bb * T * C) % 8 == 0]
    return max(aligned or feasible)


# ----------------------------------------------------------------------------
# Wrapper.
# ----------------------------------------------------------------------------
def prepare_params(word, w1, w2, w3, b3, wa, ba, compute_dtype=jnp.bfloat16):
    """Hoist per-call work that only depends on the (static) weights:
    bf16 weight casts and the batch-invariant fc_2_f(word_features) matmul."""
    V, D = w1.shape
    fwd = jnp.dot(word, w2, preferred_element_type=jnp.float32)             # (C, D) f32
    return dict(
        fwd=fwd,
        w1=w1.astype(compute_dtype),
        w3=w3.astype(compute_dtype),
        b3=b3.reshape(1, D).astype(jnp.float32),
        wa=wa.astype(compute_dtype),
        ba=ba.reshape(1, V).astype(jnp.float32),
    )


def semantic_fmri_forward(img, params, *, elem_dtype=None, coef_dtype=None):
    """img: (B, T, V). Returns (graph_net_input (B, C, V) f32,
    coefficient (B, T, C, V) in `coef_dtype`)."""
    B, T, V = img.shape
    fwd = params["fwd"]
    w1_c, w3_c, b3_2d, wa_c, ba_2d = (params["w1"], params["w3"], params["b3"],
                                      params["wa"], params["ba"])
    C, D = fwd.shape
    assert w1_c.shape == (V, D) and w3_c.shape == (D, D) and wa_c.shape == (D, V)
    assert D == V, "module semantics require intermediary_dim == voxel_num"

    gen = _tpu_generation()
    compute_dtype = w1_c.dtype
    if elem_dtype is None:
        # bf16 tanh only where the VPU/EUP has a bf16 path (v6e/v7x); f32 on v5e.
        elem_dtype = jnp.bfloat16 if (gen >= 6 and compute_dtype == jnp.bfloat16) \
            else jnp.float32
    if coef_dtype is None:
        # v5e: coef is the dominant HBM writeback and v5e has the least HBM BW.
        coef_dtype = jnp.bfloat16 if gen == 5 else jnp.float32

    img_c = img.astype(compute_dtype)
    elem_isz = np.dtype(compute_dtype).itemsize
    coef_isz = np.dtype(coef_dtype).itemsize

    # ~82% of physical VMEM: ~104 MiB on v5e/v6e, ~52 MiB on v7x (headroom for
    # compiler scratch / semaphores).
    vmem_cap = (_vmem_capacity_bytes(gen) * 13) // 16
    min_steps = 2 if gen >= 7 else 1  # keep >= 2 grid steps for v7x's 2 TensorCores
    BB = _pick_block_batch(
        B, T, C,
        footprint=lambda bb: _block_vmem_bytes(bb, T, C, V, D, elem_isz, coef_isz, True),
        vmem_budget=vmem_cap,
        min_grid_steps=min_steps)
    grid = (B // BB,)

    kernel = functools.partial(semantic_fmri_kernel, elem_dtype=elem_dtype)

    def _run(single_buffer_weights):
        blk = _block_vmem_bytes(BB, T, C, V, D, elem_isz, coef_isz,
                                single_buffer_weights)
        vmem_limit = int(min(max(blk + (4 << 20), 32 << 20), vmem_cap))
        # Grid-invariant operands don't need double buffering.
        w_kw = ({"pipeline_mode": pl.Buffered(1)} if single_buffer_weights else {})
        call = pl.pallas_call(
            kernel,
            out_shape=(
                jax.ShapeDtypeStruct((B, C, V), jnp.float32),
                jax.ShapeDtypeStruct((B, T, C, V), coef_dtype),
            ),
            grid_spec=pltpu.PrefetchScalarGridSpec(
                num_scalar_prefetch=0,
                grid=grid,
                in_specs=[
                    pl.BlockSpec((BB, T, V), lambda b: (b, 0, 0)),          # img block
                    pl.BlockSpec((C, D), lambda b: (0, 0), **w_kw),         # fwd (invariant)
                    pl.BlockSpec((V, D), lambda b: (0, 0), **w_kw),         # w1
                    pl.BlockSpec((D, D), lambda b: (0, 0), **w_kw),         # w3
                    pl.BlockSpec((1, D), lambda b: (0, 0), **w_kw),         # b3
                    pl.BlockSpec((D, V), lambda b: (0, 0), **w_kw),         # wa
                    pl.BlockSpec((1, V), lambda b: (0, 0), **w_kw),         # ba
                ],
                out_specs=[
                    pl.BlockSpec((BB, C, V), lambda b: (b, 0, 0)),
                    # If profiling shows the coef writeback DMA exposed, bump this
                    # spec to pipeline_mode=pl.Buffered(3) on v5e/v6e (VMEM headroom).
                    pl.BlockSpec((BB, T, C, V), lambda b: (b, 0, 0, 0)),
                ],
            ),
            compiler_params=pltpu.CompilerParams(
                dimension_semantics=("parallel",),
                vmem_limit_bytes=vmem_limit),
        )
        return call(img_c, fwd, w1_c, w3_c, b3_2d, wa_c, ba_2d)

    try:
        return _run(True)
    except Exception:
        # pl.Buffered(1) single-buffering not accepted by this jax build:
        # fall back to default (double-buffered) specs — semantically identical.
        return _run(False)


def reference_forward(img, word, w1, w2, w3, b3, wa, ba,
                      compute_dtype=jnp.bfloat16, elem_dtype=jnp.float32):
    """Pure-JAX mirror of the PyTorch forward (eval mode), with the same
    compute/elementwise dtype choices as the kernel so the comparison isolates
    kernel structure."""
    B, T, V = img.shape
    C = word.shape[0]
    D = w1.shape[1]
    cd = compute_dtype
    fwh = jnp.dot(img.reshape(B * T, V).astype(cd), w1.astype(cd),
                  preferred_element_type=jnp.float32)                       # (B*T, D)
    fwd = jnp.dot(word, w2, preferred_element_type=jnp.float32)             # (C, D)
    h = jnp.tanh(fwh.astype(elem_dtype)[:, None, :] * fwd.astype(elem_dtype)[None, :, :])
    h = h.reshape(B * T * C, D).astype(cd)
    lb = jnp.dot(h, w3.astype(cd), preferred_element_type=jnp.float32) + b3
    logits = (jnp.dot(lb.astype(cd), wa.astype(cd),
                      preferred_element_type=jnp.float32) + ba).reshape(B, T, C, V)
    coef = jax.nn.softmax(logits, axis=1)                                   # softmax over T
    graph = jnp.sum(lb.reshape(B, T, C, V) * coef, axis=1)                  # (B, C, V)
    return graph, coef


if __name__ == "__main__":
    # Small shapes consistent with the module:
    B = 2              # batch_size
    T = 8              # timepoints_num
    C = 4              # num_classes
    V = 128            # voxel_num (== intermediary_dim, required by the module's view)
    D = 128            # intermediary_dim
    Wd = 32            # word_feature_dim

    key = jax.random.PRNGKey(0)
    k_img, k_word, k1, k2, k3, kb3, ka, kba = jax.random.split(key, 8)

    img = jax.random.normal(k_img, (B, T, V), dtype=jnp.float32)
    word = jax.random.normal(k_word, (C, Wd), dtype=jnp.float32)

    # Deterministic PyTorch-Linear-like init, pre-transposed (in, out).
    def init_w(k, fan_in, shape):
        bound = 1.0 / np.sqrt(fan_in)
        return jax.random.uniform(k, shape, jnp.float32, -bound, bound)

    w1 = init_w(k1, V, (V, D))     # fc_1_f.weight.T
    w2 = init_w(k2, Wd, (Wd, D))   # fc_2_f.weight.T
    w3 = init_w(k3, D, (D, D))     # fc_3_f.weight.T
    b3 = init_w(kb3, D, (D,))      # fc_3_f.bias
    wa = init_w(ka, D, (D, V))     # fc_a_f.weight.T
    ba = init_w(kba, D, (V,))      # fc_a_f.bias

    gen = _tpu_generation()
    elem_dt = jnp.bfloat16 if gen >= 6 else jnp.float32   # bf16 tanh on v6e/v7x only
    coef_dt = jnp.bfloat16 if gen == 5 else jnp.float32   # bf16 coef writeback on v5e

    params = prepare_params(word, w1, w2, w3, b3, wa, ba, compute_dtype=jnp.bfloat16)
    graph, coef = semantic_fmri_forward(img, params, elem_dtype=elem_dt, coef_dtype=coef_dt)
    graph = jax.block_until_ready(graph)
    coef = jax.block_until_ready(coef)

    graph_ref, coef_ref = reference_forward(img, word, w1, w2, w3, b3, wa, ba,
                                            compute_dtype=jnp.bfloat16, elem_dtype=elem_dt)
    np.testing.assert_allclose(np.asarray(graph), np.asarray(graph_ref),
                               rtol=1e-2, atol=1e-2)
    np.testing.assert_allclose(np.asarray(coef.astype(jnp.float32)),
                               np.asarray(coef_ref), rtol=1e-2, atol=2e-3)

    # TODO(synk): dropout layers are treated as identity (eval mode); training-mode
    # stochastic masking would need pltpu.prng_seed / prng_random_bits in-kernel.
    print("KERNEL_OK")
</pallas_src>

<mosaic_0001>
module attributes {stable_mosaic.version = 11 : i64} {
  func.func @semantic_fmri_kernel(%arg0: i32, %arg1: memref<2x8x128xbf16, #tpu.memory_space<vmem>>, %arg2: memref<4x128xf32, #tpu.memory_space<vmem>>, %arg3: memref<128x128xbf16, #tpu.memory_space<vmem>>, %arg4: memref<128x128xbf16, #tpu.memory_space<vmem>>, %arg5: memref<1x128xf32, #tpu.memory_space<vmem>>, %arg6: memref<128x128xbf16, #tpu.memory_space<vmem>>, %arg7: memref<1x128xf32, #tpu.memory_space<vmem>>, %arg8: memref<2x4x128xf32, #tpu.memory_space<vmem>>, %arg9: memref<2x8x4x128xf32, #tpu.memory_space<vmem>>) attributes {dimension_semantics = [#tpu.dimension_semantics<parallel>], iteration_bounds = array<i64: 1>, scalar_prefetch = 0 : i64, scratch_operands = 0 : i64, tpu.core_type = #tpu.core_type<tc>, window_params = [{transform_indices = @transform_0, window_bounds = array<i64: 2, 8, 128>}, {pipeline_mode = #tpu.pipeline_mode<synchronous>, transform_indices = @transform_1, window_bounds = array<i64: 4, 128>}, {pipeline_mode = #tpu.pipeline_mode<synchronous>, transform_indices = @transform_2, window_bounds = array<i64: 128, 128>}, {pipeline_mode = #tpu.pipeline_mode<synchronous>, transform_indices = @transform_3, window_bounds = array<i64: 128, 128>}, {pipeline_mode = #tpu.pipeline_mode<synchronous>, transform_indices = @transform_4, window_bounds = array<i64: 1, 128>}, {pipeline_mode = #tpu.pipeline_mode<synchronous>, transform_indices = @transform_5, window_bounds = array<i64: 128, 128>}, {pipeline_mode = #tpu.pipeline_mode<synchronous>, transform_indices = @transform_6, window_bounds = array<i64: 1, 128>}, {transform_indices = @transform_7, window_bounds = array<i64: 2, 4, 128>}, {transform_indices = @transform_8, window_bounds = array<i64: 2, 8, 4, 128>}]} {
    %c0 = arith.constant 0 : index
    %c0_0 = arith.constant 0 : index
    %c0_1 = arith.constant 0 : index
    %0 = vector.load %arg1[%c0, %c0_0, %c0_1] : memref<2x8x128xbf16, #tpu.memory_space<vmem>>, vector<2x8x128xbf16>
    %1 = vector.shape_cast %0 : vector<2x8x128xbf16> to vector<16x128xbf16>
    %c0_2 = arith.constant 0 : index
    %c0_3 = arith.constant 0 : index
    %2 = vector.load %arg3[%c0_2, %c0_3] : memref<128x128xbf16, #tpu.memory_space<vmem>>, vector<128x128xbf16>
    %cst = arith.constant dense<0.000000e+00> : vector<16x128xf32>
    %3 = tpu.matmul %1, %2, %cst {dimension_numbers = #tpu.dot_dimension_numbers<[1], [0], [0], [1], [0, 0, 1, 1], [], []>} : vector<16x128xbf16>, vector<128x128xbf16>, vector<16x128xf32> -> vector<16x128xf32>
    %c0_4 = arith.constant 0 : index
    %c0_5 = arith.constant 0 : index
    %4 = vector.load %arg2[%c0_4, %c0_5] : memref<4x128xf32, #tpu.memory_space<vmem>>, vector<4x128xf32>
    %5 = arith.truncf %3 : vector<16x128xf32> to vector<16x128xbf16>
    %6 = arith.truncf %4 : vector<4x128xf32> to vector<4x128xbf16>
    %7 = vector.shape_cast %5 : vector<16x128xbf16> to vector<16x1x128xbf16>
    %8 = vector.shape_cast %6 : vector<4x128xbf16> to vector<1x4x128xbf16>
    %9 = vector.broadcast %7 : vector<16x1x128xbf16> to vector<16x4x128xbf16>
    %10 = vector.broadcast %8 : vector<1x4x128xbf16> to vector<16x4x128xbf16>
    %11 = arith.mulf %9, %10 : vector<16x4x128xbf16>
    %12 = math.tanh %11 : vector<16x4x128xbf16>
    %13 = vector.shape_cast %12 : vector<16x4x128xbf16> to vector<64x128xbf16>
    %c0_6 = arith.constant 0 : index
    %c0_7 = arith.constant 0 : index
    %14 = vector.load %arg4[%c0_6, %c0_7] : memref<128x128xbf16, #tpu.memory_space<vmem>>, vector<128x128xbf16>
    %cst_8 = arith.constant dense<0.000000e+00> : vector<64x128xf32>
    %15 = tpu.matmul %13, %14, %cst_8 {dimension_numbers = #tpu.dot_dimension_numbers<[1], [0], [0], [1], [0, 0, 1, 1], [], []>} : vector<64x128xbf16>, vector<128x128xbf16>, vector<64x128xf32> -> vector<64x128xf32>
    %c0_9 = arith.constant 0 : index
    %c0_10 = arith.constant 0 : index
    %16 = vector.load %arg5[%c0_9, %c0_10] : memref<1x128xf32, #tpu.memory_space<vmem>>, vector<1x128xf32>
    %17 = vector.broadcast %16 : vector<1x128xf32> to vector<64x128xf32>
    %18 = arith.addf %15, %17 : vector<64x128xf32>
    %19 = arith.truncf %18 : vector<64x128xf32> to vector<64x128xbf16>
    %c0_11 = arith.constant 0 : index
    %c0_12 = arith.constant 0 : index
    %20 = vector.load %arg6[%c0_11, %c0_12] : memref<128x128xbf16, #tpu.memory_space<vmem>>, vector<128x128xbf16>
    %cst_13 = arith.constant dense<0.000000e+00> : vector<64x128xf32>
    %21 = tpu.matmul %19, %20, %cst_13 {dimension_numbers = #tpu.dot_dimension_numbers<[1], [0], [0], [1], [0, 0, 1, 1], [], []>} : vector<64x128xbf16>, vector<128x128xbf16>, vector<64x128xf32> -> vector<64x128xf32>
    %c0_14 = arith.constant 0 : index
    %c0_15 = arith.constant 0 : index
    %22 = vector.load %arg7[%c0_14, %c0_15] : memref<1x128xf32, #tpu.memory_space<vmem>>, vector<1x128xf32>
    %23 = vector.broadcast %22 : vector<1x128xf32> to vector<64x128xf32>
    %24 = arith.addf %21, %23 : vector<64x128xf32>
    %25 = vector.shape_cast %24 : vector<64x128xf32> to vector<2x8x4x128xf32>
    %cst_16 = arith.constant dense<0xFF800000> : vector<2x4x128xf32>
    %26 = vector.multi_reduction <maximumf>, %25, %cst_16 [1] : vector<2x8x4x128xf32> to vector<2x4x128xf32>
    %27 = vector.shape_cast %26 : vector<2x4x128xf32> to vector<2x1x4x128xf32>
    %28 = vector.broadcast %27 : vector<2x1x4x128xf32> to vector<2x8x4x128xf32>
    %29 = arith.subf %25, %28 : vector<2x8x4x128xf32>
    %30 = math.exp %29 : vector<2x8x4x128xf32>
    %cst_17 = arith.constant dense<0.000000e+00> : vector<2x4x128xf32>
    %31 = vector.multi_reduction <add>, %30, %cst_17 [1] : vector<2x8x4x128xf32> to vector<2x4x128xf32>
    %32 = vector.shape_cast %31 : vector<2x4x128xf32> to vector<2x1x4x128xf32>
    %33 = tpu.reciprocal %32 {approx = true} : vector<2x1x4x128xf32> -> vector<2x1x4x128xf32>
    %34 = vector.broadcast %33 : vector<2x1x4x128xf32> to vector<2x8x4x128xf32>
    %35 = arith.mulf %30, %34 : vector<2x8x4x128xf32>
    %36 = vector.shape_cast %18 : vector<64x128xf32> to vector<2x8x4x128xf32>
    %37 = arith.mulf %36, %35 : vector<2x8x4x128xf32>
    %cst_18 = arith.constant dense<0.000000e+00> : vector<2x4x128xf32>
    %38 = vector.multi_reduction <add>, %37, %cst_18 [1] : vector<2x8x4x128xf32> to vector<2x4x128xf32>
    %c0_19 = arith.constant 0 : index
    %c0_20 = arith.constant 0 : index
    %c0_21 = arith.constant 0 : index
    %39 = vector.load %arg8[%c0_19, %c0_20, %c0_21] : memref<2x4x128xf32, #tpu.memory_space<vmem>>, vector<2x4x128xf32>
    tpu.vector_store %arg8[%c0_19, %c0_20, %c0_21], %38 {strides = array<i32>} : memref<2x4x128xf32, #tpu.memory_space<vmem>>, vector<2x4x128xf32>,
    %c0_22 = arith.constant 0 : index
    %c0_23 = arith.constant 0 : index
    %c0_24 = arith.constant 0 : index
    %c0_25 = arith.constant 0 : index
    %40 = vector.load %arg9[%c0_22, %c0_23, %c0_24, %c0_25] : memref<2x8x4x128xf32, #tpu.memory_space<vmem>>, vector<2x8x4x128xf32>
    tpu.vector_store %arg9[%c0_22, %c0_23, %c0_24, %c0_25], %35 {strides = array<i32>} : memref<2x8x4x128xf32, #tpu.memory_space<vmem>>, vector<2x8x4x128xf32>,
    return
  }
  func.func @transform_0(%arg0: i32) -> (i32, i32, i32) {
    %c0_i32 = arith.constant 0 : i32
    %c0_i32_0 = arith.constant 0 : i32
    %c0_i32_1 = arith.constant 0 : i32
    return %arg0, %c0_i32, %c0_i32_0 : i32, i32, i32
  }
  func.func @transform_1(%arg0: i32) -> (i32, i32) {
    %c0_i32 = arith.constant 0 : i32
    %c0_i32_0 = arith.constant 0 : i32
    %c0_i32_1 = arith.constant 0 : i32
    return %c0_i32, %c0_i32_0 : i32, i32
  }
  func.func @transform_2(%arg0: i32) -> (i32, i32) {
    %c0_i32 = arith.constant 0 : i32
    %c0_i32_0 = arith.constant 0 : i32
    %c0_i32_1 = arith.constant 0 : i32
    return %c0_i32, %c0_i32_0 : i32, i32
  }
  func.func @transform_3(%arg0: i32) -> (i32, i32) {
    %c0_i32 = arith.constant 0 : i32
    %c0_i32_0 = arith.constant 0 : i32
    %c0_i32_1 = arith.constant 0 : i32
    return %c0_i32, %c0_i32_0 : i32, i32
  }
  func.func @transform_4(%arg0: i32) -> (i32, i32) {
    %c0_i32 = arith.constant 0 : i32
    %c0_i32_0 = arith.constant 0 : i32
    %c0_i32_1 = arith.constant 0 : i32
    return %c0_i32, %c0_i32_0 : i32, i32
  }
  func.func @transform_5(%arg0: i32) -> (i32, i32) {
    %c0_i32 = arith.constant 0 : i32
    %c0_i32_0 = arith.constant 0 : i32
    %c0_i32_1 = arith.constant 0 : i32
    return %c0_i32, %c0_i32_0 : i32, i32
  }
  func.func @transform_6(%arg0: i32) -> (i32, i32) {
    %c0_i32 = arith.constant 0 : i32
    %c0_i32_0 = arith.constant 0 : i32
    %c0_i32_1 = arith.constant 0 : i32
    return %c0_i32, %c0_i32_0 : i32, i32
  }
  func.func @transform_7(%arg0: i32) -> (i32, i32, i32) {
    %c0_i32 = arith.constant 0 : i32
    %c0_i32_0 = arith.constant 0 : i32
    %c0_i32_1 = arith.constant 0 : i32
    return %arg0, %c0_i32, %c0_i32_0 : i32, i32, i32
  }
  func.func @transform_8(%arg0: i32) -> (i32, i32, i32, i32) {
    %c0_i32 = arith.constant 0 : i32
    %c0_i32_0 = arith.constant 0 : i32
    %c0_i32_1 = arith.constant 0 : i32
    %c0_i32_2 = arith.constant 0 : i32
    return %arg0, %c0_i32, %c0_i32_0, %c0_i32_1 : i32, i32, i32, i32
  }
}

module attributes {stable_mosaic.version = 11 : i64} {
  func.func @semantic_fmri_kernel(%arg0: i32, %arg1: memref<2x8x128xbf16, #tpu.memory_space<vmem>>, %arg2: memref<4x128xf32, #tpu.memory_space<vmem>>, %arg3: memref<128x128xbf16, #tpu.memory_space<vmem>>, %arg4: memref<128x128xbf16, #tpu.memory_space<vmem>>, %arg5: memref<1x128xf32, #tpu.memory_space<vmem>>, %arg6: memref<128x128xbf16, #tpu.memory_space<vmem>>, %arg7: memref<1x128xf32, #tpu.memory_space<vmem>>, %arg8: memref<2x4x128xf32, #tpu.memory_space<vmem>>, %arg9: memref<2x8x4x128xf32, #tpu.memory_space<vmem>>) attributes {dimension_semantics = [#tpu.dimension_semantics<parallel>], iteration_bounds = array<i64: 1>, scalar_prefetch = 0 : i64, scratch_operands = 0 : i64, tpu.core_type = #tpu.core_type<tc>, window_params = [{transform_indices = @transform_0, window_bounds = array<i64: 2, 8, 128>}, {pipeline_mode = #tpu.pipeline_mode<synchronous>, transform_indices = @transform_1, window_bounds = array<i64: 4, 128>}, {pipeline_mode = #tpu.pipeline_mode<synchronous>, transform_indices = @transform_2, window_bounds = array<i64: 128, 128>}, {pipeline_mode = #tpu.pipeline_mode<synchronous>, transform_indices = @transform_3, window_bounds = array<i64: 128, 128>}, {pipeline_mode = #tpu.pipeline_mode<synchronous>, transform_indices = @transform_4, window_bounds = array<i64: 1, 128>}, {pipeline_mode = #tpu.pipeline_mode<synchronous>, transform_indices = @transform_5, window_bounds = array<i64: 128, 128>}, {pipeline_mode = #tpu.pipeline_mode<synchronous>, transform_indices = @transform_6, window_bounds = array<i64: 1, 128>}, {transform_indices = @transform_7, window_bounds = array<i64: 2, 4, 128>}, {transform_indices = @transform_8, window_bounds = array<i64: 2, 8, 4, 128>}]} {
    %c0 = arith.constant 0 : index
    %c0_0 = arith.constant 0 : index
    %c0_1 = arith.constant 0 : index
    %0 = vector.load %arg1[%c0, %c0_0, %c0_1] : memref<2x8x128xbf16, #tpu.memory_space<vmem>>, vector<2x8x128xbf16>
    %1 = vector.shape_cast %0 : vector<2x8x128xbf16> to vector<16x128xbf16>
    %c0_2 = arith.constant 0 : index
    %c0_3 = arith.constant 0 : index
    %2 = vector.load %arg3[%c0_2, %c0_3] : memref<128x128xbf16, #tpu.memory_space<vmem>>, vector<128x128xbf16>
    %cst = arith.constant dense<0.000000e+00> : vector<16x128xf32>
    %3 = tpu.matmul %1, %2, %cst {dimension_numbers = #tpu.dot_dimension_numbers<[1], [0], [0], [1], [0, 0, 1, 1], [], []>} : vector<16x128xbf16>, vector<128x128xbf16>, vector<16x128xf32> -> vector<16x128xf32>
    %c0_4 = arith.constant 0 : index
    %c0_5 = arith.constant 0 : index
    %4 = vector.load %arg2[%c0_4, %c0_5] : memref<4x128xf32, #tpu.memory_space<vmem>>, vector<4x128xf32>
    %5 = arith.truncf %3 : vector<16x128xf32> to vector<16x128xbf16>
    %6 = arith.truncf %4 : vector<4x128xf32> to vector<4x128xbf16>
    %7 = vector.shape_cast %5 : vector<16x128xbf16> to vector<16x1x128xbf16>
    %8 = vector.shape_cast %6 : vector<4x128xbf16> to vector<1x4x128xbf16>
    %9 = vector.broadcast %7 : vector<16x1x128xbf16> to vector<16x4x128xbf16>
    %10 = vector.broadcast %8 : vector<1x4x128xbf16> to vector<16x4x128xbf16>
    %11 = arith.mulf %9, %10 : vector<16x4x128xbf16>
    %12 = math.tanh %11 : vector<16x4x128xbf16>
    %13 = vector.shape_cast %12 : vector<16x4x128xbf16> to vector<64x128xbf16>
    %c0_6 = arith.constant 0 : index
    %c0_7 = arith.constant 0 : index
    %14 = vector.load %arg4[%c0_6, %c0_7] : memref<128x128xbf16, #tpu.memory_space<vmem>>, vector<128x128xbf16>
    %cst_8 = arith.constant dense<0.000000e+00> : vector<64x128xf32>
    %15 = tpu.matmul %13, %14, %cst_8 {dimension_numbers = #tpu.dot_dimension_numbers<[1], [0], [0], [1], [0, 0, 1, 1], [], []>} : vector<64x128xbf16>, vector<128x128xbf16>, vector<64x128xf32> -> vector<64x128xf32>
    %c0_9 = arith.constant 0 : index
    %c0_10 = arith.constant 0 : index
    %16 = vector.load %arg5[%c0_9, %c0_10] : memref<1x128xf32, #tpu.memory_space<vmem>>, vector<1x128xf32>
    %17 = vector.broadcast %16 : vector<1x128xf32> to vector<64x128xf32>
    %18 = arith.addf %15, %17 : vector<64x128xf32>
    %19 = arith.truncf %18 : vector<64x128xf32> to vector<64x128xbf16>
    %c0_11 = arith.constant 0 : index
    %c0_12 = arith.constant 0 : index
    %20 = vector.load %arg6[%c0_11, %c0_12] : memref<128x128xbf16, #tpu.memory_space<vmem>>, vector<128x128xbf16>
    %cst_13 = arith.constant dense<0.000000e+00> : vector<64x128xf32>
    %21 = tpu.matmul %19, %20, %cst_13 {dimension_numbers = #tpu.dot_dimension_numbers<[1], [0], [0], [1], [0, 0, 1, 1], [], []>} : vector<64x128xbf16>, vector<128x128xbf16>, vector<64x128xf32> -> vector<64x128xf32>
    %c0_14 = arith.constant 0 : index
    %c0_15 = arith.constant 0 : index
    %22 = vector.load %arg7[%c0_14, %c0_15] : memref<1x128xf32, #tpu.memory_space<vmem>>, vector<1x128xf32>
    %23 = vector.broadcast %22 : vector<1x128xf32> to vector<64x128xf32>
    %24 = arith.addf %21, %23 : vector<64x128xf32>
    %25 = vector.shape_cast %24 : vector<64x128xf32> to vector<2x8x4x128xf32>
    %cst_16 = arith.constant dense<0xFF800000> : vector<2x4x128xf32>
    %26 = vector.multi_reduction <maximumf>, %25, %cst_16 [1] : vector<2x8x4x128xf32> to vector<2x4x128xf32>
    %27 = vector.shape_cast %26 : vector<2x4x128xf32> to vector<2x1x4x128xf32>
    %28 = vector.broadcast %27 : vector<2x1x4x128xf32> to vector<2x8x4x128xf32>
    %29 = arith.subf %25, %28 : vector<2x8x4x128xf32>
    %30 = math.exp %29 : vector<2x8x4x128xf32>
    %cst_17 = arith.constant dense<0.000000e+00> : vector<2x4x128xf32>
    %31 = vector.multi_reduction <add>, %30, %cst_17 [1] : vector<2x8x4x128xf32> to vector<2x4x128xf32>
    %32 = vector.shape_cast %31 : vector<2x4x128xf32> to vector<2x1x4x128xf32>
    %33 = tpu.reciprocal %32 {approx = true} : vector<2x1x4x128xf32> -> vector<2x1x4x128xf32>
    %34 = vector.broadcast %33 : vector<2x1x4x128xf32> to vector<2x8x4x128xf32>
    %35 = arith.mulf %30, %34 : vector<2x8x4x128xf32>
    %36 = vector.shape_cast %18 : vector<64x128xf32> to vector<2x8x4x128xf32>
    %37 = arith.mulf %36, %35 : vector<2x8x4x128xf32>
    %cst_18 = arith.constant dense<0.000000e+00> : vector<2x4x128xf32>
    %38 = vector.multi_reduction <add>, %37, %cst_18 [1] : vector<2x8x4x128xf32> to vector<2x4x128xf32>
    %c0_19 = arith.constant 0 : index
    %c0_20 = arith.constant 0 : index
    %c0_21 = arith.constant 0 : index
    %39 = vector.load %arg8[%c0_19, %c0_20, %c0_21] : memref<2x4x128xf32, #tpu.memory_space<vmem>>, vector<2x4x128xf32>
    tpu.vector_store %arg8[%c0_19, %c0_20, %c0_21], %38 {strides = array<i32>} : memref<2x4x128xf32, #tpu.memory_space<vmem>>, vector<2x4x128xf32>,
    %c0_22 = arith.constant 0 : index
    %c0_23 = arith.constant 0 : index
    %c0_24 = arith.constant 0 : index
    %c0_25 = arith.constant 0 : index
    %40 = vector.load %arg9[%c0_22, %c0_23, %c0_24, %c0_25] : memref<2x8x4x128xf32, #tpu.memory_space<vmem>>, vector<2x8x4x128xf32>
    tpu.vector_store %arg9[%c0_22, %c0_23, %c0_24, %c0_25], %35 {strides = array<i32>} : memref<2x8x4x128xf32, #tpu.memory_space<vmem>>, vector<2x8x4x128xf32>,
    return
  }
  func.func @transform_0(%arg0: i32) -> (i32, i32, i32) {
    %c0_i32 = arith.constant 0 : i32
    %c0_i32_0 = arith.constant 0 : i32
    %c0_i32_1 = arith.constant 0 : i32
    return %arg0, %c0_i32, %c0_i32_0 : i32, i32, i32
  }
  func.func @transform_1(%arg0: i32) -> (i32, i32) {
    %c0_i32 = arith.constant 0 : i32
    %c0_i32_0 = arith.constant 0 : i32
    %c0_i32_1 = arith.constant 0 : i32
    return %c0_i32, %c0_i32_0 : i32, i32
  }
  func.func @transform_2(%arg0: i32) -> (i32, i32) {
    %c0_i32 = arith.constant 0 : i32
    %c0_i32_0 = arith.constant 0 : i32
    %c0_i32_1 = arith.constant 0 : i32
    return %c0_i32, %c0_i32_0 : i32, i32
  }
  func.func @transform_3(%arg0: i32) -> (i32, i32) {
    %c0_i32 = arith.constant 0 : i32
    %c0_i32_0 = arith.constant 0 : i32
    %c0_i32_1 = arith.constant 0 : i32
    return %c0_i32, %c0_i32_0 : i32, i32
  }
  func.func @transform_4(%arg0: i32) -> (i32, i32) {
    %c0_i32 = arith.constant 0 : i32
    %c0_i32_0 = arith.constant 0 : i32
    %c0_i32_1 = arith.constant 0 : i32
    return %c0_i32, %c0_i32_0 : i32, i32
  }
  func.func @transform_5(%arg0: i32) -> (i32, i32) {
    %c0_i32 = arith.constant 0 : i32
    %c0_i32_0 = arith.constant 0 : i32
    %c0_i32_1 = arith.constant 0 : i32
    return %c0_i32, %c0_i32_0 : i32, i32
  }
  func.func @transform_6(%arg0: i32) -> (i32, i32) {
    %c0_i32 = arith.constant 0 : i32
    %c0_i32_0 = arith.constant 0 : i32
    %c0_i32_1 = arith.constant 0 : i32
    return %c0_i32, %c0_i32_0 : i32, i32
  }
  func.func @transform_7(%arg0: i32) -> (i32, i32, i32) {
    %c0_i32 = arith.constant 0 : i32
    %c0_i32_0 = arith.constant 0 : i32
    %c0_i32_1 = arith.constant 0 : i32
    return %arg0, %c0_i32, %c0_i32_0 : i32, i32, i32
  }
  func.func @transform_8(%arg0: i32) -> (i32, i32, i32, i32) {
    %c0_i32 = arith.constant 0 : i32
    %c0_i32_0 = arith.constant 0 : i32
    %c0_i32_1 = arith.constant 0 : i32
    %c0_i32_2 = arith.constant 0 : i32
    return %arg0, %c0_i32, %c0_i32_0, %c0_i32_1 : i32, i32, i32, i32
  }
}

</mosaic_0001>

<llo_original>
// kernel: tpu_custom_call.1
$region0: #{tpu_custom_call.1}
  #allocation0 [shape = 'u32[]', space=smem, size = 0x4, offset = 0x4, fixed_abs, tag = 'smem constant byte address 0x4 - core index']
  #allocation1 [shape = 'u32[144,128]{1,0:T(1,128)}', space=vmem, size = 0x12000, scoped, tag = 'internal scratch']
  %s0 = inlined_call_operand.hbm [shape: bf16[2,8,128], index: 0, kind: input, shape index: {}]
  %s1 = inlined_call_operand.hbm [shape: f32[4,128], index: 1, kind: input, shape index: {}]
  %s2 = inlined_call_operand.hbm [shape: bf16[128,128], index: 2, kind: input, shape index: {}]
  %s3 = inlined_call_operand.hbm [shape: bf16[128,128], index: 3, kind: input, shape index: {}]
  %s4 = inlined_call_operand.vmem [shape: f32[1,128], index: 4, kind: input, shape index: {}]
  %s5 = inlined_call_operand.hbm [shape: bf16[128,128], index: 5, kind: input, shape index: {}]
  %s6 = inlined_call_operand.vmem [shape: f32[1,128], index: 6, kind: input, shape index: {}]
  %s7 = inlined_call_operand.hbm [shape: f32[2,4,128], index: 7, kind: output, shape index: {0}]
  %s8 = inlined_call_operand.hbm [shape: f32[2,8,4,128], index: 8, kind: output, shape index: {1}]
  %9 = xla_tuple %s7, %s8
  %s10 = sld [smem:[#allocation0]]
  $region66: #{tpu_custom_call.1} parent=0
    _
  %s12 = ssub.s32 1, %s10
  %s13 = scalar_select 0, %s12, %s10
  $region1: #{tpu_custom_call.1} parent=0
    #allocation2 [shape = 'u8[4096]{0}', space=vmem, size = 0x1000, scoped, tag = 'input window, operand 0, single buffered']
    #allocation3 [shape = 's32[1]{0}', space=sflag, size = 0x4, scoped, tag = 'scoped memory for tpu_custom_call.1']
    #allocation4 [shape = 's32[1]{0}', space=sflag, size = 0x4, scoped, tag = 'scoped memory for tpu_custom_call.1']
    #allocation5 [shape = 'u8[2048]{0}', space=vmem, size = 0x800, scoped, tag = 'input window, operand 1, single buffered']
    #allocation6 [shape = 's32[1]{0}', space=sflag, size = 0x4, scoped, tag = 'scoped memory for tpu_custom_call.1']
    #allocation7 [shape = 'u8[32768]{0}', space=vmem, size = 0x8000, scoped, tag = 'input window, operand 2, single buffered']
    #allocation8 [shape = 'u8[32768]{0}', space=vmem, size = 0x8000, scoped, tag = 'input window, operand 3, single buffered']
    #allocation9 [shape = 's32[1]{0}', space=sflag, size = 0x4, scoped, tag = 'scoped memory for tpu_custom_call.1']
    #allocation10 [shape = 'u8[32768]{0}', space=vmem, size = 0x8000, scoped, tag = 'input window, operand 5, single buffered']
    #allocation11 [shape = 'u8[4096]{0}', space=vmem, size = 0x1000, scoped, tag = 'output window, operand 0, single buffered']
    #allocation12 [shape = 'u8[32768]{0}', space=vmem, size = 0x8000, scoped, tag = 'output window, operand 1, single buffered']
    #allocation13 [shape = 's32[1]{0}', space=sflag, size = 0x4, scoped, tag = 'scoped memory for tpu_custom_call.1']
    %14 = vsyncpa [#allocation3], 0
    %15 = vsyncpa [#allocation6], 0
    %16 = vsyncpa [#allocation9], 0
    %17 = vsyncpa [#allocation4], 0
    %18 = vsyncpa [#allocation13], 0
    // Predicated region
    $region2: #{tpu_custom_call.1} parent=1 // pred_check
      _
    $region3: #{tpu_custom_call.1} parent=1 // pred_check_branch
      %20 = sbr.rel (0) target = $region5
    $region4: #{tpu_custom_call.1} parent=1 // pred_region
      %s22 = ssub.s32 128, 128
      %23 = vsyncadd [#allocation3], %s22
      %s24 = sshll.u32 [#allocation2], 4
      %s25 = int_to_ptr.vmem [resolvable:$true] %s24
      %30 = dma.hbm_to_vmem [thread:$0]  %s0, 128, %s25, [#allocation3], 64, 64, 4
    $region5: #{tpu_custom_call.1} parent=1 // pred_fallthru
      _
    // Predicated region
    $region6: #{tpu_custom_call.1} parent=1 // pred_check
      _
    $region7: #{tpu_custom_call.1} parent=1 // pred_check_branch
      %32 = sbr.rel (0) target = $region9
    $region8: #{tpu_custom_call.1} parent=1 // pred_region
      %s34 = ssub.s32 64, 64
      %35 = vsyncadd [#allocation6], %s34
      %s37 = sshll.u32 [#allocation5], 4
      %s38 = int_to_ptr.vmem [resolvable:$true] %s37
      %40 = dma.hbm_to_vmem [thread:$0]  %s1, 64, %s38, [#allocation6]
    $region9: #{tpu_custom_call.1} parent=1 // pred_fallthru
      _
    // Predicated region
    $region10: #{tpu_custom_call.1} parent=1 // pred_check
      _
    $region11: #{tpu_custom_call.1} parent=1 // pred_check_branch
      %42 = sbr.rel (0) target = $region13
    $region12: #{tpu_custom_call.1} parent=1 // pred_region
      %s44 = ssub.s32 1024, 1024
      %45 = vsyncadd [#allocation6], %s44
      %s46 = sshll.u32 [#allocation7], 4
      %s47 = int_to_ptr.vmem [resolvable:$true] %s46
      %52 = dma.hbm_to_vmem [thread:$0]  %s2, 1024, %s47, [#allocation6], 64, 64, 4
    $region13: #{tpu_custom_call.1} parent=1 // pred_fallthru
      _
    // Predicated region
    $region14: #{tpu_custom_call.1} parent=1 // pred_check
      _
    $region15: #{tpu_custom_call.1} parent=1 // pred_check_branch
      %54 = sbr.rel (0) target = $region17
    $region16: #{tpu_custom_call.1} parent=1 // pred_region
      %s56 = ssub.s32 1024, 1024
      %57 = vsyncadd [#allocation9], %s56
      %s58 = sshll.u32 [#allocation8], 4
      %s59 = int_to_ptr.vmem [resolvable:$true] %s58
      %64 = dma.hbm_to_vmem [thread:$0]  %s3, 1024, %s59, [#allocation9], 64, 64, 4
    $region17: #{tpu_custom_call.1} parent=1 // pred_fallthru
      _
    // Predicated region
    $region18: #{tpu_custom_call.1} parent=1 // pred_check
      _
    $region19: #{tpu_custom_call.1} parent=1 // pred_check_branch
      %66 = sbr.rel (0) target = $region21
    $region20: #{tpu_custom_call.1} parent=1 // pred_region
      _
    $region21: #{tpu_custom_call.1} parent=1 // pred_fallthru
      _
    // Predicated region
    $region22: #{tpu_custom_call.1} parent=1 // pred_check
      _
    $region23: #{tpu_custom_call.1} parent=1 // pred_check_branch
      %68 = sbr.rel (0) target = $region25
    $region24: #{tpu_custom_call.1} parent=1 // pred_region
      %s70 = ssub.s32 1024, 1024
      %71 = vsyncadd [#allocation9], %s70
      %s72 = sshll.u32 [#allocation10], 4
      %s73 = int_to_ptr.vmem [resolvable:$true] %s72
      %78 = dma.hbm_to_vmem [thread:$0]  %s5, 1024, %s73, [#allocation9], 64, 64, 4
    $region25: #{tpu_custom_call.1} parent=1 // pred_fallthru
      _
    // Predicated region
    $region26: #{tpu_custom_call.1} parent=1 // pred_check
      _
    $region27: #{tpu_custom_call.1} parent=1 // pred_check_branch
      %80 = sbr.rel (0) target = $region29
    $region28: #{tpu_custom_call.1} parent=1 // pred_region
      _
    $region29: #{tpu_custom_call.1} parent=1 // pred_fallthru
      _
    // Predicated region
    $region30: #{tpu_custom_call.1} parent=1 // pred_check
      _
    $region31: #{tpu_custom_call.1} parent=1 // pred_check_branch
      %82 = sbr.rel (0) target = $region33
    $region32: #{tpu_custom_call.1} parent=1 // pred_region
      %83 = dma.done [#allocation3], 128
    $region33: #{tpu_custom_call.1} parent=1 // pred_fallthru
      _
    // Predicated region
    $region34: #{tpu_custom_call.1} parent=1 // pred_check
      _
    $region35: #{tpu_custom_call.1} parent=1 // pred_check_branch
      %85 = sbr.rel (0) target = $region37
    $region36: #{tpu_custom_call.1} parent=1 // pred_region
      %86 = dma.done [#allocation6], 64
    $region37: #{tpu_custom_call.1} parent=1 // pred_fallthru
      _
    // Predicated region
    $region38: #{tpu_custom_call.1} parent=1 // pred_check
      _
    $region39: #{tpu_custom_call.1} parent=1 // pred_check_branch
      %88 = sbr.rel (0) target = $region41
    $region40: #{tpu_custom_call.1} parent=1 // pred_region
      %89 = dma.done [#allocation6], 1024
    $region41: #{tpu_custom_call.1} parent=1 // pred_fallthru
      _
    // Predicated region
    $region42: #{tpu_custom_call.1} parent=1 // pred_check
      _
    $region43: #{tpu_custom_call.1} parent=1 // pred_check_branch
      %91 = sbr.rel (0) target = $region45
    $region44: #{tpu_custom_call.1} parent=1 // pred_region
      %92 = dma.done [#allocation9], 1024
    $region45: #{tpu_custom_call.1} parent=1 // pred_fallthru
      _
    // Predicated region
    $region46: #{tpu_custom_call.1} parent=1 // pred_check
      _
    $region47: #{tpu_custom_call.1} parent=1 // pred_check_branch
      %94 = sbr.rel (0) target = $region49
    $region48: #{tpu_custom_call.1} parent=1 // pred_region
      %95 = dma.done [#allocation9], 1024
    $region49: #{tpu_custom_call.1} parent=1 // pred_fallthru
      _
    %v97 = vld [vmem:[#allocation2] sm:$0xf]
    %v98 = vld [vmem:[#allocation2 + $0x4] sm:$0xf]
    %v99 = vld [vmem:[#allocation7] sm:$0xf]
    %v100 = vld [vmem:[#allocation7 + $0x4] sm:$0xf]
    %v101 = vld [vmem:[#allocation7 + $0x8] sm:$0xf]
    %v102 = vld [vmem:[#allocation7 + $0xc] sm:$0xf]
    %v103 = vld [vmem:[#allocation7 + $0x10] sm:$0xf]
    %v104 = vld [vmem:[#allocation7 + $0x14] sm:$0xf]
    %v105 = vld [vmem:[#allocation7 + $0x18] sm:$0xf]
    %v106 = vld [vmem:[#allocation7 + $0x1c] sm:$0xf]
    %v107 = vld [vmem:[#allocation7 + $0x20] sm:$0xf]
    %v108 = vld [vmem:[#allocation7 + $0x24] sm:$0xf]
    %v109 = vld [vmem:[#allocation7 + $0x28] sm:$0xf]
    %v110 = vld [vmem:[#allocation7 + $0x2c] sm:$0xf]
    %v111 = vld [vmem:[#allocation7 + $0x30] sm:$0xf]
    %v112 = vld [vmem:[#allocation7 + $0x34] sm:$0xf]
    %v113 = vld [vmem:[#allocation7 + $0x38] sm:$0xf]
    %v114 = vld [vmem:[#allocation7 + $0x3c] sm:$0xf]
    %v117 = vunpack.c.l.b16 %v97
    %v118 = vunpack.c.l.b16 %v98
    %v119 = vpack.c.b16 %v118, %v117
    %v137 = vunpack.c.l.b16 %v99
    %v138 = vunpack.c.l.b16 %v100
    %v139 = vunpack.c.l.b16 %v101
    %v140 = vunpack.c.l.b16 %v102
    %v141 = vunpack.c.l.b16 %v103
    %v142 = vunpack.c.l.b16 %v104
    %v143 = vunpack.c.l.b16 %v105
    %v144 = vunpack.c.l.b16 %v106
    %v145 = vunpack.c.l.b16 %v107
    %v146 = vunpack.c.l.b16 %v108
    %v147 = vunpack.c.l.b16 %v109
    %v148 = vunpack.c.l.b16 %v110
    %v149 = vunpack.c.l.b16 %v111
    %v150 = vunpack.c.l.b16 %v112
    %v151 = vunpack.c.l.b16 %v113
    %v152 = vunpack.c.l.b16 %v114
    %v153 = vpack.c.b16 %v138, %v137
    %v154 = vpack.c.b16 %v140, %v139
    %v155 = vpack.c.b16 %v142, %v141
    %v156 = vpack.c.b16 %v144, %v143
    %v157 = vpack.c.b16 %v146, %v145
    %v158 = vpack.c.b16 %v148, %v147
    %v159 = vpack.c.b16 %v150, %v149
    %v160 = vpack.c.b16 %v152, %v151
    %169 = vmatprep.subr.bf16.mxu0 0
    %170 = vmatpush1.bf16.msra.mxu0 %v160
    %171 = vmatprep.subr.bf16.mxu0 0
    %172 = vmatpush1.bf16.msra.mxu0 %v159
    %173 = vmatprep.subr.bf16.mxu0 0
    %174 = vmatpush1.bf16.msra.mxu0 %v158
    %175 = vmatprep.subr.bf16.mxu0 0
    %176 = vmatpush1.bf16.msra.mxu0 %v157
    %177 = vmatprep.subr.bf16.mxu0 0
    %178 = vmatpush1.bf16.msra.mxu0 %v156
    %179 = vmatprep.subr.bf16.mxu0 0
    %180 = vmatpush1.bf16.msra.mxu0 %v155
    %181 = vmatprep.subr.bf16.mxu0 0
    %182 = vmatpush1.bf16.msra.mxu0 %v154
    %183 = vmatprep.subr.bf16.mxu0 0
    %184 = vmatpush1.bf16.msra.mxu0 %v153
    %185 = vmatprep.subr.bf16.mxu0 0
    %186 = vmatpush2.bf16.msra.mxu0 0
    %187 = vmatprep.subr.bf16.mxu0 0
    %188 = vmatpush2.bf16.msra.mxu0 0
    %189 = vmatprep.subr.bf16.mxu0 0
    %190 = vmatpush2.bf16.msra.mxu0 0
    %191 = vmatprep.subr.bf16.mxu0 0
    %192 = vmatpush2.bf16.msra.mxu0 0
    %193 = vmatprep.subr.bf16.mxu0 0
    %194 = vmatpush2.bf16.msra.mxu0 0
    %195 = vmatprep.subr.bf16.mxu0 0
    %196 = vmatpush2.bf16.msra.mxu0 0
    %197 = vmatprep.subr.bf16.mxu0 0
    %198 = vmatpush2.bf16.msra.mxu0 0
    %199 = vmatprep.subr.bf16.mxu0 0
    %200 = vmatpush2.bf16.msra.mxu0 0
    %201 = vmatprep.mubr.bf16.mxu0 0
    %202 = vmatmul.mubr.bf16.gmra.mxu0 %v119
    %v203 = vpop.f32.mrf.mxu0
    %v204 = vadd.f32 0.0, %v203
    %v205 = vpop.f32.mrf.mxu0
    %v206 = vpop.f32.mrf.mxu0
    %v207 = vadd.f32 0.0, %v206
    %v208 = vpop.f32.mrf.mxu0
    %209 = vdwg.mxu0
    %v210 = vld [vmem:[#allocation5] sm:$0xf]
    %v211 = vpack.c.bf16 %v207, %v204
    %v212 = vpack.c.bf16 %v210, %v210
    %v214 = vcombine.high %v211, %v211
    %v216 = vunpack.c.l.s4 1966171168
    %v217 = vunpack.c.0.s8 %v216
    %v218 = vlaneseq
    %v219 = vshrl.u32 %v218, 7
    %v220 = vsub.s32 %v217, %v219
    %v221 = vrot.slane %v211, %v220
    %v223 = vunpack.c.l.s4 1966171168
    %v224 = vunpack.c.0.s8 %v223
    %v225 = vlaneseq
    %v226 = vshrl.u32 %v225, 7
    %v227 = vsub.s32 %v224, %v226
    %v228 = vrot.slane %v214, %v227
    %v229 = vcombine.high %v221, %v221
    %v230 = vcombine.high %v228, %v228
    %v232 = vunpack.c.l.s4 1966171168
    %v233 = vunpack.c.0.s8 %v232
    %v234 = vlaneseq
    %v235 = vshrl.u32 %v234, 7
    %v236 = vsub.s32 %v233, %v235
    %v237 = vrot.slane %v221, %v236
    %v239 = vunpack.c.l.s4 1966171168
    %v240 = vunpack.c.0.s8 %v239
    %v241 = vlaneseq
    %v242 = vshrl.u32 %v241, 7
    %v243 = vsub.s32 %v240, %v242
    %v244 = vrot.slane %v228, %v243
    %v246 = vunpack.c.l.s4 1966171168
    %v247 = vunpack.c.0.s8 %v246
    %v248 = vlaneseq
    %v249 = vshrl.u32 %v248, 7
    %v250 = vsub.s32 %v247, %v249
    %v251 = vrot.slane %v229, %v250
    %v253 = vunpack.c.l.s4 1966171168
    %v254 = vunpack.c.0.s8 %v253
    %v255 = vlaneseq
    %v256 = vshrl.u32 %v255, 7
    %v257 = vsub.s32 %v254, %v256
    %v258 = vrot.slane %v230, %v257
    %v259 = vcombine.high %v237, %v237
    %v260 = vcombine.high %v244, %v244
    %v261 = vcombine.high %v251, %v251
    %v262 = vcombine.high %v258, %v258
    %v263 = vunpack.i.l.s16 %v237
    %v264 = vunpack.i.h.s16 %v237
    %v265 = vunpack.i.l.s16 %v251
    %v266 = vunpack.i.h.s16 %v251
    %v267 = vunpack.i.l.s16 %v259
    %v268 = vunpack.i.h.s16 %v259
    %v269 = vunpack.i.l.s16 %v261
    %v270 = vunpack.i.h.s16 %v261
    %v271 = vunpack.i.l.s16 %v244
    %v272 = vunpack.i.h.s16 %v244
    %v273 = vunpack.i.l.s16 %v258
    %v274 = vunpack.i.h.s16 %v258
    %v275 = vunpack.i.l.s16 %v260
    %v276 = vunpack.i.h.s16 %v260
    %v277 = vunpack.i.l.s16 %v262
    %v278 = vunpack.i.h.s16 %v262
    %v279 = vpack.i.b16 %v263, %v263
    %v280 = vpack.i.b16 %v264, %v264
    %v281 = vpack.i.b16 %v265, %v265
    %v282 = vpack.i.b16 %v266, %v266
    %v283 = vpack.i.b16 %v267, %v267
    %v284 = vpack.i.b16 %v268, %v268
    %v285 = vpack.i.b16 %v269, %v269
    %v286 = vpack.i.b16 %v270, %v270
    %v287 = vpack.i.b16 %v271, %v271
    %v288 = vpack.i.b16 %v272, %v272
    %v289 = vpack.i.b16 %v273, %v273
    %v290 = vpack.i.b16 %v274, %v274
    %v291 = vpack.i.b16 %v275, %v275
    %v292 = vpack.i.b16 %v276, %v276
    %v293 = vpack.i.b16 %v277, %v277
    %v294 = vpack.i.b16 %v278, %v278
    %v295 = vlaneseq
    %v296 = vshrl.u32 %v295, 7
    %v297 = vsub.s32 0, %v296
    %v298 = vrot.slane %v279, %v297
    %v299 = vlaneseq
    %v300 = vshrl.u32 %v299, 7
    %v301 = vsub.s32 0, %v300
    %v302 = vrot.slane %v280, %v301
    %v303 = vlaneseq
    %v304 = vshrl.u32 %v303, 7
    %v305 = vsub.s32 0, %v304
    %v306 = vrot.slane %v281, %v305
    %v307 = vlaneseq
    %v308 = vshrl.u32 %v307, 7
    %v309 = vsub.s32 0, %v308
    %v310 = vrot.slane %v282, %v309
    %v311 = vlaneseq
    %v312 = vshrl.u32 %v311, 7
    %v313 = vsub.s32 0, %v312
    %v314 = vrot.slane %v283, %v313
    %v315 = vlaneseq
    %v316 = vshrl.u32 %v315, 7
    %v317 = vsub.s32 0, %v316
    %v318 = vrot.slane %v284, %v317
    %v319 = vlaneseq
    %v320 = vshrl.u32 %v319, 7
    %v321 = vsub.s32 0, %v320
    %v322 = vrot.slane %v285, %v321
    %v323 = vlaneseq
    %v324 = vshrl.u32 %v323, 7
    %v325 = vsub.s32 0, %v324
    %v326 = vrot.slane %v286, %v325
    %v327 = vlaneseq
    %v328 = vshrl.u32 %v327, 7
    %v329 = vsub.s32 0, %v328
    %v330 = vrot.slane %v287, %v329
    %v331 = vlaneseq
    %v332 = vshrl.u32 %v331, 7
    %v333 = vsub.s32 0, %v332
    %v334 = vrot.slane %v288, %v333
    %v335 = vlaneseq
    %v336 = vshrl.u32 %v335, 7
    %v337 = vsub.s32 0, %v336
    %v338 = vrot.slane %v289, %v337
    %v339 = vlaneseq
    %v340 = vshrl.u32 %v339, 7
    %v341 = vsub.s32 0, %v340
    %v342 = vrot.slane %v290, %v341
    %v343 = vlaneseq
    %v344 = vshrl.u32 %v343, 7
    %v345 = vsub.s32 0, %v344
    %v346 = vrot.slane %v291, %v345
    %v347 = vlaneseq
    %v348 = vshrl.u32 %v347, 7
    %v349 = vsub.s32 0, %v348
    %v350 = vrot.slane %v292, %v349
    %v351 = vlaneseq
    %v352 = vshrl.u32 %v351, 7
    %v353 = vsub.s32 0, %v352
    %v354 = vrot.slane %v293, %v353
    %v355 = vlaneseq
    %v356 = vshrl.u32 %v355, 7
    %v357 = vsub.s32 0, %v356
    %v358 = vrot.slane %v294, %v357
    %v360 = vpack.i.b16 %v298, %v298
    %v362 = vlaneseq
    %v363 = vshrl.u32 %v362, 7
    %v364 = vsub.s32 0, %v363
    %v365 = vrot.slane %v360, %v364
    %v367 = vpack.i.b16 %v302, %v302
    %v369 = vlaneseq
    %v370 = vshrl.u32 %v369, 7
    %v371 = vsub.s32 0, %v370
    %v372 = vrot.slane %v367, %v371
    %v374 = vpack.i.b16 %v306, %v306
    %v376 = vlaneseq
    %v377 = vshrl.u32 %v376, 7
    %v378 = vsub.s32 0, %v377
    %v379 = vrot.slane %v374, %v378
    %v381 = vpack.i.b16 %v310, %v310
    %v383 = vlaneseq
    %v384 = vshrl.u32 %v383, 7
    %v385 = vsub.s32 0, %v384
    %v386 = vrot.slane %v381, %v385
    %v388 = vpack.i.b16 %v314, %v314
    %v390 = vlaneseq
    %v391 = vshrl.u32 %v390, 7
    %v392 = vsub.s32 0, %v391
    %v393 = vrot.slane %v388, %v392
    %v395 = vpack.i.b16 %v318, %v318
    %v397 = vlaneseq
    %v398 = vshrl.u32 %v397, 7
    %v399 = vsub.s32 0, %v398
    %v400 = vrot.slane %v395, %v399
    %v402 = vpack.i.b16 %v322, %v322
    %v404 = vlaneseq
    %v405 = vshrl.u32 %v404, 7
    %v406 = vsub.s32 0, %v405
    %v407 = vrot.slane %v402, %v406
    %v409 = vpack.i.b16 %v326, %v326
    %v411 = vlaneseq
    %v412 = vshrl.u32 %v411, 7
    %v413 = vsub.s32 0, %v412
    %v414 = vrot.slane %v409, %v413
    %v416 = vpack.i.b16 %v330, %v330
    %v418 = vlaneseq
    %v419 = vshrl.u32 %v418, 7
    %v420 = vsub.s32 0, %v419
    %v421 = vrot.slane %v416, %v420
    %v423 = vpack.i.b16 %v334, %v334
    %v425 = vlaneseq
    %v426 = vshrl.u32 %v425, 7
    %v427 = vsub.s32 0, %v426
    %v428 = vrot.slane %v423, %v427
    %v430 = vpack.i.b16 %v338, %v338
    %v432 = vlaneseq
    %v433 = vshrl.u32 %v432, 7
    %v434 = vsub.s32 0, %v433
    %v435 = vrot.slane %v430, %v434
    %v437 = vpack.i.b16 %v342, %v342
    %v439 = vlaneseq
    %v440 = vshrl.u32 %v439, 7
    %v441 = vsub.s32 0, %v440
    %v442 = vrot.slane %v437, %v441
    %v444 = vpack.i.b16 %v346, %v346
    %v446 = vlaneseq
    %v447 = vshrl.u32 %v446, 7
    %v448 = vsub.s32 0, %v447
    %v449 = vrot.slane %v444, %v448
    %v451 = vpack.i.b16 %v350, %v350
    %v453 = vlaneseq
    %v454 = vshrl.u32 %v453, 7
    %v455 = vsub.s32 0, %v454
    %v456 = vrot.slane %v451, %v455
    %v458 = vpack.i.b16 %v354, %v354
    %v460 = vlaneseq
    %v461 = vshrl.u32 %v460, 7
    %v462 = vsub.s32 0, %v461
    %v463 = vrot.slane %v458, %v462
    %v465 = vpack.i.b16 %v358, %v358
    %v467 = vlaneseq
    %v468 = vshrl.u32 %v467, 7
    %v469 = vsub.s32 0, %v468
    %v470 = vrot.slane %v465, %v469
    %v471 = vmul.bf16 %v365, %v212
    %v472 = vmul.bf16 %v372, %v212
    %v473 = vmul.bf16 %v379, %v212
    %v474 = vmul.bf16 %v386, %v212
    %v475 = vmul.bf16 %v393, %v212
    %v476 = vmul.bf16 %v400, %v212
    %v477 = vmul.bf16 %v407, %v212
    %v478 = vmul.bf16 %v414, %v212
    %v479 = vmul.bf16 %v421, %v212
    %v480 = vmul.bf16 %v428, %v212
    %v481 = vmul.bf16 %v435, %v212
    %v482 = vmul.bf16 %v442, %v212
    %v483 = vmul.bf16 %v449, %v212
    %v484 = vmul.bf16 %v456, %v212
    %v485 = vmul.bf16 %v463, %v212
    %v486 = vmul.bf16 %v470, %v212
    %v487 = vtanh.bf16.pop %v471
    %v488 = vtanh.bf16.pop %v472
    %v489 = vtanh.bf16.pop %v473
    %v490 = vtanh.bf16.pop %v474
    %v491 = vtanh.bf16.pop %v475
    %v492 = vtanh.bf16.pop %v476
    %v493 = vtanh.bf16.pop %v477
    %v494 = vtanh.bf16.pop %v478
    %v495 = vtanh.bf16.pop %v479
    %v496 = vtanh.bf16.pop %v480
    %v497 = vtanh.bf16.pop %v481
    %v498 = vtanh.bf16.pop %v482
    %v499 = vtanh.bf16.pop %v483
    %v500 = vtanh.bf16.pop %v484
    %v501 = vtanh.bf16.pop %v485
    %v502 = vtanh.bf16.pop %v486
    %v503 = vld [vmem:[#allocation8] sm:$0xf]
    %v504 = vld [vmem:[#allocation8 + $0x4] sm:$0xf]
    %v505 = vld [vmem:[#allocation8 + $0x8] sm:$0xf]
    %v506 = vld [vmem:[#allocation8 + $0xc] sm:$0xf]
    %v507 = vld [vmem:[#allocation8 + $0x10] sm:$0xf]
    %v508 = vld [vmem:[#allocation8 + $0x14] sm:$0xf]
    %v509 = vld [vmem:[#allocation8 + $0x18] sm:$0xf]
    %v510 = vld [vmem:[#allocation8 + $0x1c] sm:$0xf]
    %v511 = vld [vmem:[#allocation8 + $0x20] sm:$0xf]
    %v512 = vld [vmem:[#allocation8 + $0x24] sm:$0xf]
    %v513 = vld [vmem:[#allocation8 + $0x28] sm:$0xf]
    %v514 = vld [vmem:[#allocation8 + $0x2c] sm:$0xf]
    %v515 = vld [vmem:[#allocation8 + $0x30] sm:$0xf]
    %v516 = vld [vmem:[#allocation8 + $0x34] sm:$0xf]
    %v517 = vld [vmem:[#allocation8 + $0x38] sm:$0xf]
    %v518 = vld [vmem:[#allocation8 + $0x3c] sm:$0xf]
    %v519 = vld [vmem:[%s4] sm:$0x1]
    %v521 = vlaneseq
    %v522 = vshrl.u32 %v521, 7
    %v523 = vsub.s32 0, %v522
    %v524 = vrot.slane %v519, %v523
    %v542 = vcombine.low %v487, %v488
    %v543 = vcombine.low %v489, %v490
    %v545 = vunpack.c.l.s4 1983009808
    %v546 = vunpack.c.0.s8 %v545
    %v547 = vlaneseq
    %v548 = vshrl.u32 %v547, 7
    %v549 = vsub.s32 %v546, %v548
    %v550 = vrot.slane %v542, %v549
    %v552 = vunpack.c.l.s4 1983009808
    %v553 = vunpack.c.0.s8 %v552
    %v554 = vlaneseq
    %v555 = vshrl.u32 %v554, 7
    %v556 = vsub.s32 %v553, %v555
    %v557 = vrot.slane %v543, %v556
    %v558 = vcombine.low %v550, %v557
    %v559 = vcombine.low %v491, %v492
    %v560 = vcombine.low %v493, %v494
    %v562 = vunpack.c.l.s4 1983009808
    %v563 = vunpack.c.0.s8 %v562
    %v564 = vlaneseq
    %v565 = vshrl.u32 %v564, 7
    %v566 = vsub.s32 %v563, %v565
    %v567 = vrot.slane %v559, %v566
    %v569 = vunpack.c.l.s4 1983009808
    %v570 = vunpack.c.0.s8 %v569
    %v571 = vlaneseq
    %v572 = vshrl.u32 %v571, 7
    %v573 = vsub.s32 %v570, %v572
    %v574 = vrot.slane %v560, %v573
    %v575 = vcombine.low %v567, %v574
    %v576 = vcombine.low %v495, %v496
    %v577 = vcombine.low %v497, %v498
    %v579 = vunpack.c.l.s4 1983009808
    %v580 = vunpack.c.0.s8 %v579
    %v581 = vlaneseq
    %v582 = vshrl.u32 %v581, 7
    %v583 = vsub.s32 %v580, %v582
    %v584 = vrot.slane %v576, %v583
    %v586 = vunpack.c.l.s4 1983009808
    %v587 = vunpack.c.0.s8 %v586
    %v588 = vlaneseq
    %v589 = vshrl.u32 %v588, 7
    %v590 = vsub.s32 %v587, %v589
    %v591 = vrot.slane %v577, %v590
    %v592 = vcombine.low %v584, %v591
    %v593 = vcombine.low %v499, %v500
    %v594 = vcombine.low %v501, %v502
    %v596 = vunpack.c.l.s4 1983009808
    %v597 = vunpack.c.0.s8 %v596
    %v598 = vlaneseq
    %v599 = vshrl.u32 %v598, 7
    %v600 = vsub.s32 %v597, %v599
    %v601 = vrot.slane %v593, %v600
    %v603 = vunpack.c.l.s4 1983009808
    %v604 = vunpack.c.0.s8 %v603
    %v605 = vlaneseq
    %v606 = vshrl.u32 %v605, 7
    %v607 = vsub.s32 %v604, %v606
    %v608 = vrot.slane %v594, %v607
    %v609 = vcombine.low %v601, %v608
    %v630 = vunpack.c.l.b16 %v503
    %v631 = vunpack.c.l.b16 %v504
    %v632 = vunpack.c.l.b16 %v505
    %v633 = vunpack.c.l.b16 %v506
    %v634 = vunpack.c.l.b16 %v507
    %v635 = vunpack.c.l.b16 %v508
    %v636 = vunpack.c.l.b16 %v509
    %v637 = vunpack.c.l.b16 %v510
    %v638 = vunpack.c.l.b16 %v511
    %v639 = vunpack.c.l.b16 %v512
    %v640 = vunpack.c.l.b16 %v513
    %v641 = vunpack.c.l.b16 %v514
    %v642 = vunpack.c.l.b16 %v515
    %v643 = vunpack.c.l.b16 %v516
    %v644 = vunpack.c.l.b16 %v517
    %v645 = vunpack.c.l.b16 %v518
    %v646 = vpack.c.b16 %v631, %v630
    %v647 = vpack.c.b16 %v633, %v632
    %v648 = vpack.c.b16 %v635, %v634
    %v649 = vpack.c.b16 %v637, %v636
    %v650 = vpack.c.b16 %v639, %v638
    %v651 = vpack.c.b16 %v641, %v640
    %v652 = vpack.c.b16 %v643, %v642
    %v653 = vpack.c.b16 %v645, %v644
    %662 = vmatprep.subr.bf16.mxu0 0
    %663 = vmatpush1.bf16.msra.mxu0 %v653
    %664 = vmatprep.subr.bf16.mxu0 0
    %665 = vmatpush1.bf16.msra.mxu0 %v652
    %666 = vmatprep.subr.bf16.mxu0 0
    %667 = vmatpush1.bf16.msra.mxu0 %v651
    %668 = vmatprep.subr.bf16.mxu0 0
    %669 = vmatpush1.bf16.msra.mxu0 %v650
    %670 = vmatprep.subr.bf16.mxu0 0
    %671 = vmatpush1.bf16.msra.mxu0 %v649
    %672 = vmatprep.subr.bf16.mxu0 0
    %673 = vmatpush1.bf16.msra.mxu0 %v648
    %674 = vmatprep.subr.bf16.mxu0 0
    %675 = vmatpush1.bf16.msra.mxu0 %v647
    %676 = vmatprep.subr.bf16.mxu0 0
    %677 = vmatpush1.bf16.msra.mxu0 %v646
    %678 = vmatprep.subr.bf16.mxu0 0
    %679 = vmatpush2.bf16.msra.mxu0 0
    %680 = vmatprep.subr.bf16.mxu0 0
    %681 = vmatpush2.bf16.msra.mxu0 0
    %682 = vmatprep.subr.bf16.mxu0 0
    %683 = vmatpush2.bf16.msra.mxu0 0
    %684 = vmatprep.subr.bf16.mxu0 0
    %685 = vmatpush2.bf16.msra.mxu0 0
    %686 = vmatprep.subr.bf16.mxu0 0
    %687 = vmatpush2.bf16.msra.mxu0 0
    %688 = vmatprep.subr.bf16.mxu0 0
    %689 = vmatpush2.bf16.msra.mxu0 0
    %690 = vmatprep.subr.bf16.mxu0 0
    %691 = vmatpush2.bf16.msra.mxu0 0
    %692 = vmatprep.subr.bf16.mxu0 0
    %693 = vmatpush2.bf16.msra.mxu0 0
    %694 = vmatprep.mubr.bf16.mxu0 0
    %695 = vmatmul.mubr.bf16.gmra.mxu0 %v558
    %v696 = vpop.f32.mrf.mxu0
    %v697 = vadd.f32 %v524, %v696
    %v698 = vpop.f32.mrf.mxu0
    %v699 = vpop.f32.mrf.mxu0
    %v700 = vadd.f32 %v524, %v699
    %v701 = vpop.f32.mrf.mxu0
    %702 = vmatprep.mubr.bf16.mxu0 0
    %703 = vmatmul.mubr.bf16.gmra.mxu0 %v575
    %v704 = vpop.f32.mrf.mxu0
    %v705 = vadd.f32 %v524, %v704
    %v706 = vpop.f32.mrf.mxu0
    %v707 = vpop.f32.mrf.mxu0
    %v708 = vadd.f32 %v524, %v707
    %v709 = vpop.f32.mrf.mxu0
    %710 = vmatprep.mubr.bf16.mxu0 0
    %711 = vmatmul.mubr.bf16.gmra.mxu0 %v592
    %v712 = vpop.f32.mrf.mxu0
    %v713 = vadd.f32 %v524, %v712
    %v714 = vpop.f32.mrf.mxu0
    %v715 = vpop.f32.mrf.mxu0
    %v716 = vadd.f32 %v524, %v715
    %v717 = vpop.f32.mrf.mxu0
    %718 = vmatprep.mubr.bf16.mxu0 0
    %719 = vmatmul.mubr.bf16.gmra.mxu0 %v609
    %v720 = vpop.f32.mrf.mxu0
    %v721 = vadd.f32 %v524, %v720
    %v722 = vpop.f32.mrf.mxu0
    %v723 = vpop.f32.mrf.mxu0
    %v724 = vadd.f32 %v524, %v723
    %v725 = vpop.f32.mrf.mxu0
    %726 = vdwg.mxu0
    %v727 = vpack.c.bf16 %v700, %v697
    %v728 = vpack.c.bf16 %v708, %v705
    %v729 = vpack.c.bf16 %v716, %v713
    %v730 = vpack.c.bf16 %v724, %v721
    %v731 = vld [vmem:[#allocation10] sm:$0xf]
    %v732 = vld [vmem:[#allocation10 + $0x4] sm:$0xf]
    %v733 = vld [vmem:[#allocation10 + $0x8] sm:$0xf]
    %v734 = vld [vmem:[#allocation10 + $0xc] sm:$0xf]
    %v735 = vld [vmem:[#allocation10 + $0x10] sm:$0xf]
    %v736 = vld [vmem:[#allocation10 + $0x14] sm:$0xf]
    %v737 = vld [vmem:[#allocation10 + $0x18] sm:$0xf]
    %v738 = vld [vmem:[#allocation10 + $0x1c] sm:$0xf]
    %v739 = vld [vmem:[#allocation10 + $0x20] sm:$0xf]
    %v740 = vld [vmem:[#allocation10 + $0x24] sm:$0xf]
    %v741 = vld [vmem:[#allocation10 + $0x28] sm:$0xf]
    %v742 = vld [vmem:[#allocation10 + $0x2c] sm:$0xf]
    %v743 = vld [vmem:[#allocation10 + $0x30] sm:$0xf]
    %v744 = vld [vmem:[#allocation10 + $0x34] sm:$0xf]
    %v745 = vld [vmem:[#allocation10 + $0x38] sm:$0xf]
    %v746 = vld [vmem:[#allocation10 + $0x3c] sm:$0xf]
    %v747 = vld [vmem:[%s6] sm:$0x1]
    %v749 = vlaneseq
    %v750 = vshrl.u32 %v749, 7
    %v751 = vsub.s32 0, %v750
    %v752 = vrot.slane %v747, %v751
    %v770 = vunpack.c.l.b16 %v731
    %v771 = vunpack.c.l.b16 %v732
    %v772 = vunpack.c.l.b16 %v733
    %v773 = vunpack.c.l.b16 %v734
    %v774 = vunpack.c.l.b16 %v735
    %v775 = vunpack.c.l.b16 %v736
    %v776 = vunpack.c.l.b16 %v737
    %v777 = vunpack.c.l.b16 %v738
    %v778 = vunpack.c.l.b16 %v739
    %v779 = vunpack.c.l.b16 %v740
    %v780 = vunpack.c.l.b16 %v741
    %v781 = vunpack.c.l.b16 %v742
    %v782 = vunpack.c.l.b16 %v743
    %v783 = vunpack.c.l.b16 %v744
    %v784 = vunpack.c.l.b16 %v745
    %v785 = vunpack.c.l.b16 %v746
    %v786 = vpack.c.b16 %v771, %v770
    %v787 = vpack.c.b16 %v773, %v772
    %v788 = vpack.c.b16 %v775, %v774
    %v789 = vpack.c.b16 %v777, %v776
    %v790 = vpack.c.b16 %v779, %v778
    %v791 = vpack.c.b16 %v781, %v780
    %v792 = vpack.c.b16 %v783, %v782
    %v793 = vpack.c.b16 %v785, %v784
    %802 = vmatprep.subr.bf16.mxu0 0
    %803 = vmatpush1.bf16.msra.mxu0 %v793
    %804 = vmatprep.subr.bf16.mxu0 0
    %805 = vmatpush1.bf16.msra.mxu0 %v792
    %806 = vmatprep.subr.bf16.mxu0 0
    %807 = vmatpush1.bf16.msra.mxu0 %v791
    %808 = vmatprep.subr.bf16.mxu0 0
    %809 = vmatpush1.bf16.msra.mxu0 %v790
    %810 = vmatprep.subr.bf16.mxu0 0
    %811 = vmatpush1.bf16.msra.mxu0 %v789
    %812 = vmatprep.subr.bf16.mxu0 0
    %813 = vmatpush1.bf16.msra.mxu0 %v788
    %814 = vmatprep.subr.bf16.mxu0 0
    %815 = vmatpush1.bf16.msra.mxu0 %v787
    %816 = vmatprep.subr.bf16.mxu0 0
    %817 = vmatpush1.bf16.msra.mxu0 %v786
    %818 = vmatprep.subr.bf16.mxu0 0
    %819 = vmatpush2.bf16.msra.mxu0 0
    %820 = vmatprep.subr.bf16.mxu0 0
    %821 = vmatpush2.bf16.msra.mxu0 0
    %822 = vmatprep.subr.bf16.mxu0 0
    %823 = vmatpush2.bf16.msra.mxu0 0
    %824 = vmatprep.subr.bf16.mxu0 0
    %825 = vmatpush2.bf16.msra.mxu0 0
    %826 = vmatprep.subr.bf16.mxu0 0
    %827 = vmatpush2.bf16.msra.mxu0 0
    %828 = vmatprep.subr.bf16.mxu0 0
    %829 = vmatpush2.bf16.msra.mxu0 0
    %830 = vmatprep.subr.bf16.mxu0 0
    %831 = vmatpush2.bf16.msra.mxu0 0
    %832 = vmatprep.subr.bf16.mxu0 0
    %833 = vmatpush2.bf16.msra.mxu0 0
    %834 = vmatprep.mubr.bf16.mxu0 0
    %835 = vmatmul.mubr.bf16.gmra.mxu0 %v727
    %v836 = vpop.f32.mrf.mxu0
    %v837 = vadd.f32 %v752, %v836
    %v838 = vpop.f32.mrf.mxu0
    %v839 = vpop.f32.mrf.mxu0
    %v840 = vadd.f32 %v752, %v839
    %v841 = vpop.f32.mrf.mxu0
    %842 = vmatprep.mubr.bf16.mxu0 0
    %843 = vmatmul.mubr.bf16.gmra.mxu0 %v728
    %v844 = vpop.f32.mrf.mxu0
    %v845 = vadd.f32 %v752, %v844
    %v846 = vpop.f32.mrf.mxu0
    %v847 = vpop.f32.mrf.mxu0
    %v848 = vadd.f32 %v752, %v847
    %v849 = vpop.f32.mrf.mxu0
    %850 = vmatprep.mubr.bf16.mxu0 0
    %851 = vmatmul.mubr.bf16.gmra.mxu0 %v729
    %v852 = vpop.f32.mrf.mxu0
    %v853 = vadd.f32 %v752, %v852
    %v854 = vpop.f32.mrf.mxu0
    %v855 = vpop.f32.mrf.mxu0
    %v856 = vadd.f32 %v752, %v855
    %v857 = vpop.f32.mrf.mxu0
    %858 = vmatprep.mubr.bf16.mxu0 0
    %859 = vmatmul.mubr.bf16.gmra.mxu0 %v730
    %v860 = vpop.f32.mrf.mxu0
    %v861 = vadd.f32 %v752, %v860
    %v862 = vpop.f32.mrf.mxu0
    %v863 = vpop.f32.mrf.mxu0
    %v864 = vadd.f32 %v752, %v863
    %v865 = vpop.f32.mrf.mxu0
    %866 = vdwg.mxu0
    %v875 = vcombine.high %v837, %v837
    %v876 = vcombine.high %v840, %v840
    %v877 = vcombine.high %v845, %v845
    %v878 = vcombine.high %v848, %v848
    %v879 = vcombine.high %v853, %v853
    %v880 = vcombine.high %v856, %v856
    %v881 = vcombine.high %v861, %v861
    %v882 = vcombine.high %v864, %v864
    %vm891 = vcmask 1043456
    %v892 = vsel %vm891, %v837, -inf
    %v893 = vsel %vm891, %v875, -inf
    %v894 = vsel %vm891, %v840, -inf
    %v895 = vmax.f32 %v892, %v894
    %v896 = vsel %vm891, %v876, -inf
    %v897 = vmax.f32 %v893, %v896
    %v898 = vsel %vm891, %v845, -inf
    %v899 = vmax.f32 %v895, %v898
    %v900 = vsel %vm891, %v877, -inf
    %v901 = vmax.f32 %v897, %v900
    %v902 = vsel %vm891, %v848, -inf
    %v903 = vmax.f32 %v899, %v902
    %v904 = vsel %vm891, %v878, -inf
    %v905 = vmax.f32 %v901, %v904
    %v906 = vmax.f32 %v903, %v905
    %v907 = vsel %vm891, %v853, -inf
    %v908 = vsel %vm891, %v879, -inf
    %v909 = vsel %vm891, %v856, -inf
    %v910 = vmax.f32 %v907, %v909
    %v911 = vsel %vm891, %v880, -inf
    %v912 = vmax.f32 %v908, %v911
    %v913 = vsel %vm891, %v861, -inf
    %v914 = vmax.f32 %v910, %v913
    %v915 = vsel %vm891, %v881, -inf
    %v916 = vmax.f32 %v912, %v915
    %v917 = vsel %vm891, %v864, -inf
    %v918 = vmax.f32 %v914, %v917
    %v919 = vsel %vm891, %v882, -inf
    %v920 = vmax.f32 %v916, %v919
    %v921 = vmax.f32 %v918, %v920
    %v922 = vsub.f32 %v837, %v906
    %v923 = vsub.f32 %v875, %v906
    %v924 = vsub.f32 %v840, %v906
    %v925 = vsub.f32 %v876, %v906
    %v926 = vsub.f32 %v845, %v906
    %v927 = vsub.f32 %v877, %v906
    %v928 = vsub.f32 %v848, %v906
    %v929 = vsub.f32 %v878, %v906
    %v930 = vsub.f32 %v853, %v921
    %v931 = vsub.f32 %v879, %v921
    %v932 = vsub.f32 %v856, %v921
    %v933 = vsub.f32 %v880, %v921
    %v934 = vsub.f32 %v861, %v921
    %v935 = vsub.f32 %v881, %v921
    %v936 = vsub.f32 %v864, %v921
    %v937 = vsub.f32 %v882, %v921
    %v938 = vmul.f32 %v922, 1.442695
    %v939 = vpow.pop %v938
    %v940 = vmul.f32 %v923, 1.442695
    %v941 = vpow.pop %v940
    %v942 = vmul.f32 %v924, 1.442695
    %v943 = vpow.pop %v942
    %v944 = vmul.f32 %v925, 1.442695
    %v945 = vpow.pop %v944
    %v946 = vmul.f32 %v926, 1.442695
    %v947 = vpow.pop %v946
    %v948 = vmul.f32 %v927, 1.442695
    %v949 = vpow.pop %v948
    %v950 = vmul.f32 %v928, 1.442695
    %v951 = vpow.pop %v950
    %v952 = vmul.f32 %v929, 1.442695
    %v953 = vpow.pop %v952
    %v954 = vmul.f32 %v930, 1.442695
    %v955 = vpow.pop %v954
    %v956 = vmul.f32 %v931, 1.442695
    %v957 = vpow.pop %v956
    %v958 = vmul.f32 %v932, 1.442695
    %v959 = vpow.pop %v958
    %v960 = vmul.f32 %v933, 1.442695
    %v961 = vpow.pop %v960
    %v962 = vmul.f32 %v934, 1.442695
    %v963 = vpow.pop %v962
    %v964 = vmul.f32 %v935, 1.442695
    %v965 = vpow.pop %v964
    %v966 = vmul.f32 %v936, 1.442695
    %v967 = vpow.pop %v966
    %v968 = vmul.f32 %v937, 1.442695
    %v969 = vpow.pop %v968
    %v970 = vsel %vm891, %v939, 0.0
    %v971 = vsel %vm891, %v941, 0.0
    %v972 = vadd.f32 %v970, %v971
    %v973 = vsel %vm891, %v943, 0.0
    %v974 = vadd.f32 %v972, %v973
    %v975 = vsel %vm891, %v945, 0.0
    %v976 = vadd.f32 %v974, %v975
    %v977 = vsel %vm891, %v947, 0.0
    %v978 = vadd.f32 %v976, %v977
    %v979 = vsel %vm891, %v949, 0.0
    %v980 = vadd.f32 %v978, %v979
    %v981 = vsel %vm891, %v951, 0.0
    %v982 = vadd.f32 %v980, %v981
    %v983 = vsel %vm891, %v953, 0.0
    %v984 = vadd.f32 %v982, %v983
    %v985 = vsel %vm891, %v955, 0.0
    %v986 = vsel %vm891, %v957, 0.0
    %v987 = vadd.f32 %v985, %v986
    %v988 = vsel %vm891, %v959, 0.0
    %v989 = vadd.f32 %v987, %v988
    %v990 = vsel %vm891, %v961, 0.0
    %v991 = vadd.f32 %v989, %v990
    %v992 = vsel %vm891, %v963, 0.0
    %v993 = vadd.f32 %v991, %v992
    %v994 = vsel %vm891, %v965, 0.0
    %v995 = vadd.f32 %v993, %v994
    %v996 = vsel %vm891, %v967, 0.0
    %v997 = vadd.f32 %v995, %v996
    %v998 = vsel %vm891, %v969, 0.0
    %v999 = vadd.f32 %v997, %v998
    %v1000 = vrcp.pop %v984
    %v1001 = vrcp.pop %v999
    %v1002 = vmul.f32 %v939, %v1000
    %v1003 = vmul.f32 %v941, %v1000
    %v1004 = vmul.f32 %v943, %v1000
    %v1005 = vmul.f32 %v945, %v1000
    %v1006 = vmul.f32 %v947, %v1000
    %v1007 = vmul.f32 %v949, %v1000
    %v1008 = vmul.f32 %v951, %v1000
    %v1009 = vmul.f32 %v953, %v1000
    %v1010 = vmul.f32 %v955, %v1001
    %v1011 = vmul.f32 %v957, %v1001
    %v1012 = vmul.f32 %v959, %v1001
    %v1013 = vmul.f32 %v961, %v1001
    %v1014 = vmul.f32 %v963, %v1001
    %v1015 = vmul.f32 %v965, %v1001
    %v1016 = vmul.f32 %v967, %v1001
    %v1017 = vmul.f32 %v969, %v1001
    %v1026 = vcombine.high %v697, %v697
    %v1027 = vcombine.high %v700, %v700
    %v1028 = vcombine.high %v705, %v705
    %v1029 = vcombine.high %v708, %v708
    %v1030 = vcombine.high %v713, %v713
    %v1031 = vcombine.high %v716, %v716
    %v1032 = vcombine.high %v721, %v721
    %v1033 = vcombine.high %v724, %v724
    %v1042 = vmul.f32 %v697, %v1002
    %v1043 = vmul.f32 %v1026, %v1003
    %v1044 = vmul.f32 %v700, %v1004
    %v1045 = vmul.f32 %v1027, %v1005
    %v1046 = vmul.f32 %v705, %v1006
    %v1047 = vmul.f32 %v1028, %v1007
    %v1048 = vmul.f32 %v708, %v1008
    %v1049 = vmul.f32 %v1029, %v1009
    %v1050 = vmul.f32 %v713, %v1010
    %v1051 = vmul.f32 %v1030, %v1011
    %v1052 = vmul.f32 %v716, %v1012
    %v1053 = vmul.f32 %v1031, %v1013
    %v1054 = vmul.f32 %v721, %v1014
    %v1055 = vmul.f32 %v1032, %v1015
    %v1056 = vmul.f32 %v724, %v1016
    %v1057 = vmul.f32 %v1033, %v1017
    %v1058 = vsel %vm891, %v1042, 0.0
    %v1059 = vsel %vm891, %v1043, 0.0
    %v1060 = vadd.f32 %v1058, %v1059
    %v1061 = vsel %vm891, %v1044, 0.0
    %v1062 = vadd.f32 %v1060, %v1061
    %v1063 = vsel %vm891, %v1045, 0.0
    %v1064 = vadd.f32 %v1062, %v1063
    %v1065 = vsel %vm891, %v1046, 0.0
    %v1066 = vadd.f32 %v1064, %v1065
    %v1067 = vsel %vm891, %v1047, 0.0
    %v1068 = vadd.f32 %v1066, %v1067
    %v1069 = vsel %vm891, %v1048, 0.0
    %v1070 = vadd.f32 %v1068, %v1069
    %v1071 = vsel %vm891, %v1049, 0.0
    %v1072 = vadd.f32 %v1070, %v1071
    %v1073 = vsel %vm891, %v1050, 0.0
    %v1074 = vsel %vm891, %v1051, 0.0
    %v1075 = vadd.f32 %v1073, %v1074
    %v1076 = vsel %vm891, %v1052, 0.0
    %v1077 = vadd.f32 %v1075, %v1076
    %v1078 = vsel %vm891, %v1053, 0.0
    %v1079 = vadd.f32 %v1077, %v1078
    %v1080 = vsel %vm891, %v1054, 0.0
    %v1081 = vadd.f32 %v1079, %v1080
    %v1082 = vsel %vm891, %v1055, 0.0
    %v1083 = vadd.f32 %v1081, %v1082
    %v1084 = vsel %vm891, %v1056, 0.0
    %v1085 = vadd.f32 %v1083, %v1084
    %v1086 = vsel %vm891, %v1057, 0.0
    %v1087 = vadd.f32 %v1085, %v1086
    %1088 = vst [vmem:[#allocation11] sm:$0xf] %v1072
    %1089 = vst [vmem:[#allocation11 + $0x4] sm:$0xf] %v1087
    %1090 = vst [vmem:[#allocation12] sm:$0xf] %v1002
    %1091 = vst [vmem:[#allocation12 + $0x4] sm:$0xf] %v1003
    %1092 = vst [vmem:[#allocation12 + $0x8] sm:$0xf] %v1004
    %1093 = vst [vmem:[#allocation12 + $0xc] sm:$0xf] %v1005
    %1094 = vst [vmem:[#allocation12 + $0x10] sm:$0xf] %v1006
    %1095 = vst [vmem:[#allocation12 + $0x14] sm:$0xf] %v1007
    %1096 = vst [vmem:[#allocation12 + $0x18] sm:$0xf] %v1008
    %1097 = vst [vmem:[#allocation12 + $0x1c] sm:$0xf] %v1009
    %1098 = vst [vmem:[#allocation12 + $0x20] sm:$0xf] %v1010
    %1099 = vst [vmem:[#allocation12 + $0x24] sm:$0xf] %v1011
    %1100 = vst [vmem:[#allocation12 + $0x28] sm:$0xf] %v1012
    %1101 = vst [vmem:[#allocation12 + $0x2c] sm:$0xf] %v1013
    %1102 = vst [vmem:[#allocation12 + $0x30] sm:$0xf] %v1014
    %1103 = vst [vmem:[#allocation12 + $0x34] sm:$0xf] %v1015
    %1104 = vst [vmem:[#allocation12 + $0x38] sm:$0xf] %v1016
    %1105 = vst [vmem:[#allocation12 + $0x3c] sm:$0xf] %v1017
    // Predicated region
    $region50: #{tpu_custom_call.1} parent=1 // pred_check
      _
    $region51: #{tpu_custom_call.1} parent=1 // pred_check_branch
      %1107 = sbr.rel (0) target = $region53
    $region52: #{tpu_custom_call.1} parent=1 // pred_region
      %s1109 = ssub.s32 128, 128
      %1110 = vsyncadd [#allocation4], %s1109
      %s1111 = sshll.u32 [#allocation11], 4
      %s1112 = int_to_ptr.vmem [resolvable:$true] %s1111
      %1117 = dma.vmem_to_hbm [thread:$0]  %s1112, 128, %s7, [#allocation4], 64, 64, 4
    $region53: #{tpu_custom_call.1} parent=1 // pred_fallthru
      _
    // Predicated region
    $region54: #{tpu_custom_call.1} parent=1 // pred_check
      _
    $region55: #{tpu_custom_call.1} parent=1 // pred_check_branch
      %1119 = sbr.rel (0) target = $region57
    $region56: #{tpu_custom_call.1} parent=1 // pred_region
      %s1121 = ssub.s32 1024, 1024
      %1122 = vsyncadd [#allocation13], %s1121
      %s1123 = sshll.u32 [#allocation12], 4
      %s1124 = int_to_ptr.vmem [resolvable:$true] %s1123
      %1129 = dma.vmem_to_hbm [thread:$0]  %s1124, 1024, %s8, [#allocation13], 64, 64, 4
    $region57: #{tpu_custom_call.1} parent=1 // pred_fallthru
      _
    // Predicated region
    $region58: #{tpu_custom_call.1} parent=1 // pred_check
      _
    $region59: #{tpu_custom_call.1} parent=1 // pred_check_branch
      %1131 = sbr.rel (0) target = $region61
    $region60: #{tpu_custom_call.1} parent=1 // pred_region
      %1132 = dma.done [#allocation4], 128
    $region61: #{tpu_custom_call.1} parent=1 // pred_fallthru
      _
    // Predicated region
    $region62: #{tpu_custom_call.1} parent=1 // pred_check
      _
    $region63: #{tpu_custom_call.1} parent=1 // pred_check_branch
      %1134 = sbr.rel (0) target = $region65
    $region64: #{tpu_custom_call.1} parent=1 // pred_region
      %1135 = dma.done [#allocation13], 1024
    $region65: #{tpu_custom_call.1} parent=1 // pred_fallthru
      _
    %1136 = vsyncpa [#allocation3], 1
    %1137 = vsyncpa [#allocation6], 1
    %1138 = vsyncpa [#allocation9], 1
    %1139 = vsyncpa [#allocation4], 1
    %1140 = vsyncpa [#allocation13], 1

// kernel: tpu_custom_call.1
$region0: #{tpu_custom_call.1}
  #allocation0 [shape = 'u32[]', space=smem, size = 0x4, offset = 0x4, fixed_abs, tag = 'smem constant byte address 0x4 - core index']
  #allocation1 [shape = 'u32[144,128]{1,0:T(1,128)}', space=vmem, size = 0x12000, scoped, tag = 'internal scratch']
  %s0 = inlined_call_operand.hbm [shape: bf16[2,8,128], index: 0, kind: input, shape index: {}]
  %s1 = inlined_call_operand.hbm [shape: f32[4,128], index: 1, kind: input, shape index: {}]
  %s2 = inlined_call_operand.hbm [shape: bf16[128,128], index: 2, kind: input, shape index: {}]
  %s3 = inlined_call_operand.hbm [shape: bf16[128,128], index: 3, kind: input, shape index: {}]
  %s4 = inlined_call_operand.vmem [shape: f32[1,128], index: 4, kind: input, shape index: {}]
  %s5 = inlined_call_operand.hbm [shape: bf16[128,128], index: 5, kind: input, shape index: {}]
  %s6 = inlined_call_operand.vmem [shape: f32[1,128], index: 6, kind: input, shape index: {}]
  %s7 = inlined_call_operand.hbm [shape: f32[2,4,128], index: 7, kind: output, shape index: {0}]
  %s8 = inlined_call_operand.hbm [shape: f32[2,8,4,128], index: 8, kind: output, shape index: {1}]
  %9 = xla_tuple %s7, %s8
  %s10 = sld [smem:[#allocation0]]
  $region66: #{tpu_custom_call.1} parent=0
    _
  %s12 = ssub.s32 1, %s10
  %s13 = scalar_select 0, %s12, %s10
  $region1: #{tpu_custom_call.1} parent=0
    #allocation2 [shape = 'u8[4096]{0}', space=vmem, size = 0x1000, scoped, tag = 'input window, operand 0, single buffered']
    #allocation3 [shape = 's32[1]{0}', space=sflag, size = 0x4, scoped, tag = 'scoped memory for tpu_custom_call.1']
    #allocation4 [shape = 's32[1]{0}', space=sflag, size = 0x4, scoped, tag = 'scoped memory for tpu_custom_call.1']
    #allocation5 [shape = 'u8[2048]{0}', space=vmem, size = 0x800, scoped, tag = 'input window, operand 1, single buffered']
    #allocation6 [shape = 's32[1]{0}', space=sflag, size = 0x4, scoped, tag = 'scoped memory for tpu_custom_call.1']
    #allocation7 [shape = 'u8[32768]{0}', space=vmem, size = 0x8000, scoped, tag = 'input window, operand 2, single buffered']
    #allocation8 [shape = 'u8[32768]{0}', space=vmem, size = 0x8000, scoped, tag = 'input window, operand 3, single buffered']
    #allocation9 [shape = 's32[1]{0}', space=sflag, size = 0x4, scoped, tag = 'scoped memory for tpu_custom_call.1']
    #allocation10 [shape = 'u8[32768]{0}', space=vmem, size = 0x8000, scoped, tag = 'input window, operand 5, single buffered']
    #allocation11 [shape = 'u8[4096]{0}', space=vmem, size = 0x1000, scoped, tag = 'output window, operand 0, single buffered']
    #allocation12 [shape = 'u8[32768]{0}', space=vmem, size = 0x8000, scoped, tag = 'output window, operand 1, single buffered']
    #allocation13 [shape = 's32[1]{0}', space=sflag, size = 0x4, scoped, tag = 'scoped memory for tpu_custom_call.1']
    %14 = vsyncpa [#allocation3], 0
    %15 = vsyncpa [#allocation6], 0
    %16 = vsyncpa [#allocation9], 0
    %17 = vsyncpa [#allocation4], 0
    %18 = vsyncpa [#allocation13], 0
    // Predicated region
    $region2: #{tpu_custom_call.1} parent=1 // pred_check
      _
    $region3: #{tpu_custom_call.1} parent=1 // pred_check_branch
      %20 = sbr.rel (0) target = $region5
    $region4: #{tpu_custom_call.1} parent=1 // pred_region
      %s22 = ssub.s32 128, 128
      %23 = vsyncadd [#allocation3], %s22
      %s24 = sshll.u32 [#allocation2], 4
      %s25 = int_to_ptr.vmem [resolvable:$true] %s24
      %30 = dma.hbm_to_vmem [thread:$0]  %s0, 128, %s25, [#allocation3], 64, 64, 4
    $region5: #{tpu_custom_call.1} parent=1 // pred_fallthru
      _
    // Predicated region
    $region6: #{tpu_custom_call.1} parent=1 // pred_check
      _
    $region7: #{tpu_custom_call.1} parent=1 // pred_check_branch
      %32 = sbr.rel (0) target = $region9
    $region8: #{tpu_custom_call.1} parent=1 // pred_region
      %s34 = ssub.s32 64, 64
      %35 = vsyncadd [#allocation6], %s34
      %s37 = sshll.u32 [#allocation5], 4
      %s38 = int_to_ptr.vmem [resolvable:$true] %s37
      %40 = dma.hbm_to_vmem [thread:$0]  %s1, 64, %s38, [#allocation6]
    $region9: #{tpu_custom_call.1} parent=1 // pred_fallthru
      _
    // Predicated region
    $region10: #{tpu_custom_call.1} parent=1 // pred_check
      _
    $region11: #{tpu_custom_call.1} parent=1 // pred_check_branch
      %42 = sbr.rel (0) target = $region13
    $region12: #{tpu_custom_call.1} parent=1 // pred_region
      %s44 = ssub.s32 1024, 1024
      %45 = vsyncadd [#allocation6], %s44
      %s46 = sshll.u32 [#allocation7], 4
      %s47 = int_to_ptr.vmem [resolvable:$true] %s46
      %52 = dma.hbm_to_vmem [thread:$0]  %s2, 1024, %s47, [#allocation6], 64, 64, 4
    $region13: #{tpu_custom_call.1} parent=1 // pred_fallthru
      _
    // Predicated region
    $region14: #{tpu_custom_call.1} parent=1 // pred_check
      _
    $region15: #{tpu_custom_call.1} parent=1 // pred_check_branch
      %54 = sbr.rel (0) target = $region17
    $region16: #{tpu_custom_call.1} parent=1 // pred_region
      %s56 = ssub.s32 1024, 1024
      %57 = vsyncadd [#allocation9], %s56
      %s58 = sshll.u32 [#allocation8], 4
      %s59 = int_to_ptr.vmem [resolvable:$true] %s58
      %64 = dma.hbm_to_vmem [thread:$0]  %s3, 1024, %s59, [#allocation9], 64, 64, 4
    $region17: #{tpu_custom_call.1} parent=1 // pred_fallthru
      _
    // Predicated region
    $region18: #{tpu_custom_call.1} parent=1 // pred_check
      _
    $region19: #{tpu_custom_call.1} parent=1 // pred_check_branch
      %66 = sbr.rel (0) target = $region21
    $region20: #{tpu_custom_call.1} parent=1 // pred_region
      _
    $region21: #{tpu_custom_call.1} parent=1 // pred_fallthru
      _
    // Predicated region
    $region22: #{tpu_custom_call.1} parent=1 // pred_check
      _
    $region23: #{tpu_custom_call.1} parent=1 // pred_check_branch
      %68 = sbr.rel (0) target = $region25
    $region24: #{tpu_custom_call.1} parent=1 // pred_region
      %s70 = ssub.s32 1024, 1024
      %71 = vsyncadd [#allocation9], %s70
      %s72 = sshll.u32 [#allocation10], 4
      %s73 = int_to_ptr.vmem [resolvable:$true] %s72
      %78 = dma.hbm_to_vmem [thread:$0]  %s5, 1024, %s73, [#allocation9], 64, 64, 4
    $region25: #{tpu_custom_call.1} parent=1 // pred_fallthru
      _
    // Predicated region
    $region26: #{tpu_custom_call.1} parent=1 // pred_check
      _
    $region27: #{tpu_custom_call.1} parent=1 // pred_check_branch
      %80 = sbr.rel (0) target = $region29
    $region28: #{tpu_custom_call.1} parent=1 // pred_region
      _
    $region29: #{tpu_custom_call.1} parent=1 // pred_fallthru
      _
    // Predicated region
    $region30: #{tpu_custom_call.1} parent=1 // pred_check
      _
    $region31: #{tpu_custom_call.1} parent=1 // pred_check_branch
      %82 = sbr.rel (0) target = $region33
    $region32: #{tpu_custom_call.1} parent=1 // pred_region
      %83 = dma.done [#allocation3], 128
    $region33: #{tpu_custom_call.1} parent=1 // pred_fallthru
      _
    // Predicated region
    $region34: #{tpu_custom_call.1} parent=1 // pred_check
      _
    $region35: #{tpu_custom_call.1} parent=1 // pred_check_branch
      %85 = sbr.rel (0) target = $region37
    $region36: #{tpu_custom_call.1} parent=1 // pred_region
      %86 = dma.done [#allocation6], 64
    $region37: #{tpu_custom_call.1} parent=1 // pred_fallthru
      _
    // Predicated region
    $region38: #{tpu_custom_call.1} parent=1 // pred_check
      _
    $region39: #{tpu_custom_call.1} parent=1 // pred_check_branch
      %88 = sbr.rel (0) target = $region41
    $region40: #{tpu_custom_call.1} parent=1 // pred_region
      %89 = dma.done [#allocation6], 1024
    $region41: #{tpu_custom_call.1} parent=1 // pred_fallthru
      _
    // Predicated region
    $region42: #{tpu_custom_call.1} parent=1 // pred_check
      _
    $region43: #{tpu_custom_call.1} parent=1 // pred_check_branch
      %91 = sbr.rel (0) target = $region45
    $region44: #{tpu_custom_call.1} parent=1 // pred_region
      %92 = dma.done [#allocation9], 1024
    $region45: #{tpu_custom_call.1} parent=1 // pred_fallthru
      _
    // Predicated region
    $region46: #{tpu_custom_call.1} parent=1 // pred_check
      _
    $region47: #{tpu_custom_call.1} parent=1 // pred_check_branch
      %94 = sbr.rel (0) target = $region49
    $region48: #{tpu_custom_call.1} parent=1 // pred_region
      %95 = dma.done [#allocation9], 1024
    $region49: #{tpu_custom_call.1} parent=1 // pred_fallthru
      _
    %v97 = vld [vmem:[#allocation2] sm:$0xf]
    %v98 = vld [vmem:[#allocation2 + $0x4] sm:$0xf]
    %v99 = vld [vmem:[#allocation7] sm:$0xf]
    %v100 = vld [vmem:[#allocation7 + $0x4] sm:$0xf]
    %v101 = vld [vmem:[#allocation7 + $0x8] sm:$0xf]
    %v102 = vld [vmem:[#allocation7 + $0xc] sm:$0xf]
    %v103 = vld [vmem:[#allocation7 + $0x10] sm:$0xf]
    %v104 = vld [vmem:[#allocation7 + $0x14] sm:$0xf]
    %v105 = vld [vmem:[#allocation7 + $0x18] sm:$0xf]
    %v106 = vld [vmem:[#allocation7 + $0x1c] sm:$0xf]
    %v107 = vld [vmem:[#allocation7 + $0x20] sm:$0xf]
    %v108 = vld [vmem:[#allocation7 + $0x24] sm:$0xf]
    %v109 = vld [vmem:[#allocation7 + $0x28] sm:$0xf]
    %v110 = vld [vmem:[#allocation7 + $0x2c] sm:$0xf]
    %v111 = vld [vmem:[#allocation7 + $0x30] sm:$0xf]
    %v112 = vld [vmem:[#allocation7 + $0x34] sm:$0xf]
    %v113 = vld [vmem:[#allocation7 + $0x38] sm:$0xf]
    %v114 = vld [vmem:[#allocation7 + $0x3c] sm:$0xf]
    %v117 = vunpack.c.l.b16 %v97
    %v118 = vunpack.c.l.b16 %v98
    %v119 = vpack.c.b16 %v118, %v117
    %v137 = vunpack.c.l.b16 %v99
    %v138 = vunpack.c.l.b16 %v100
    %v139 = vunpack.c.l.b16 %v101
    %v140 = vunpack.c.l.b16 %v102
    %v141 = vunpack.c.l.b16 %v103
    %v142 = vunpack.c.l.b16 %v104
    %v143 = vunpack.c.l.b16 %v105
    %v144 = vunpack.c.l.b16 %v106
    %v145 = vunpack.c.l.b16 %v107
    %v146 = vunpack.c.l.b16 %v108
    %v147 = vunpack.c.l.b16 %v109
    %v148 = vunpack.c.l.b16 %v110
    %v149 = vunpack.c.l.b16 %v111
    %v150 = vunpack.c.l.b16 %v112
    %v151 = vunpack.c.l.b16 %v113
    %v152 = vunpack.c.l.b16 %v114
    %v153 = vpack.c.b16 %v138, %v137
    %v154 = vpack.c.b16 %v140, %v139
    %v155 = vpack.c.b16 %v142, %v141
    %v156 = vpack.c.b16 %v144, %v143
    %v157 = vpack.c.b16 %v146, %v145
    %v158 = vpack.c.b16 %v148, %v147
    %v159 = vpack.c.b16 %v150, %v149
    %v160 = vpack.c.b16 %v152, %v151
    %169 = vmatprep.subr.bf16.mxu0 0
    %170 = vmatpush1.bf16.msra.mxu0 %v160
    %171 = vmatprep.subr.bf16.mxu0 0
    %172 = vmatpush1.bf16.msra.mxu0 %v159
    %173 = vmatprep.subr.bf16.mxu0 0
    %174 = vmatpush1.bf16.msra.mxu0 %v158
    %175 = vmatprep.subr.bf16.mxu0 0
    %176 = vmatpush1.bf16.msra.mxu0 %v157
    %177 = vmatprep.subr.bf16.mxu0 0
    %178 = vmatpush1.bf16.msra.mxu0 %v156
    %179 = vmatprep.subr.bf16.mxu0 0
    %180 = vmatpush1.bf16.msra.mxu0 %v155
    %181 = vmatprep.subr.bf16.mxu0 0
    %182 = vmatpush1.bf16.msra.mxu0 %v154
    %183 = vmatprep.subr.bf16.mxu0 0
    %184 = vmatpush1.bf16.msra.mxu0 %v153
    %185 = vmatprep.subr.bf16.mxu0 0
    %186 = vmatpush2.bf16.msra.mxu0 0
    %187 = vmatprep.subr.bf16.mxu0 0
    %188 = vmatpush2.bf16.msra.mxu0 0
    %189 = vmatprep.subr.bf16.mxu0 0
    %190 = vmatpush2.bf16.msra.mxu0 0
    %191 = vmatprep.subr.bf16.mxu0 0
    %192 = vmatpush2.bf16.msra.mxu0 0
    %193 = vmatprep.subr.bf16.mxu0 0
    %194 = vmatpush2.bf16.msra.mxu0 0
    %195 = vmatprep.subr.bf16.mxu0 0
    %196 = vmatpush2.bf16.msra.mxu0 0
    %197 = vmatprep.subr.bf16.mxu0 0
    %198 = vmatpush2.bf16.msra.mxu0 0
    %199 = vmatprep.subr.bf16.mxu0 0
    %200 = vmatpush2.bf16.msra.mxu0 0
    %201 = vmatprep.mubr.bf16.mxu0 0
    %202 = vmatmul.mubr.bf16.gmra.mxu0 %v119
    %v203 = vpop.f32.mrf.mxu0
    %v204 = vadd.f32 0.0, %v203
    %v205 = vpop.f32.mrf.mxu0
    %v206 = vpop.f32.mrf.mxu0
    %v207 = vadd.f32 0.0, %v206
    %v208 = vpop.f32.mrf.mxu0
    %209 = vdwg.mxu0
    %v210 = vld [vmem:[#allocation5] sm:$0xf]
    %v211 = vpack.c.bf16 %v207, %v204
    %v212 = vpack.c.bf16 %v210, %v210
    %v214 = vcombine.high %v211, %v211
    %v216 = vunpack.c.l.s4 1966171168
    %v217 = vunpack.c.0.s8 %v216
    %v218 = vlaneseq
    %v219 = vshrl.u32 %v218, 7
    %v220 = vsub.s32 %v217, %v219
    %v221 = vrot.slane %v211, %v220
    %v223 = vunpack.c.l.s4 1966171168
    %v224 = vunpack.c.0.s8 %v223
    %v225 = vlaneseq
    %v226 = vshrl.u32 %v225, 7
    %v227 = vsub.s32 %v224, %v226
    %v228 = vrot.slane %v214, %v227
    %v229 = vcombine.high %v221, %v221
    %v230 = vcombine.high %v228, %v228
    %v232 = vunpack.c.l.s4 1966171168
    %v233 = vunpack.c.0.s8 %v232
    %v234 = vlaneseq
    %v235 = vshrl.u32 %v234, 7
    %v236 = vsub.s32 %v233, %v235
    %v237 = vrot.slane %v221, %v236
    %v239 = vunpack.c.l.s4 1966171168
    %v240 = vunpack.c.0.s8 %v239
    %v241 = vlaneseq
    %v242 = vshrl.u32 %v241, 7
    %v243 = vsub.s32 %v240, %v242
    %v244 = vrot.slane %v228, %v243
    %v246 = vunpack.c.l.s4 1966171168
    %v247 = vunpack.c.0.s8 %v246
    %v248 = vlaneseq
    %v249 = vshrl.u32 %v248, 7
    %v250 = vsub.s32 %v247, %v249
    %v251 = vrot.slane %v229, %v250
    %v253 = vunpack.c.l.s4 1966171168
    %v254 = vunpack.c.0.s8 %v253
    %v255 = vlaneseq
    %v256 = vshrl.u32 %v255, 7
    %v257 = vsub.s32 %v254, %v256
    %v258 = vrot.slane %v230, %v257
    %v259 = vcombine.high %v237, %v237
    %v260 = vcombine.high %v244, %v244
    %v261 = vcombine.high %v251, %v251
    %v262 = vcombine.high %v258, %v258
    %v263 = vunpack.i.l.s16 %v237
    %v264 = vunpack.i.h.s16 %v237
    %v265 = vunpack.i.l.s16 %v251
    %v266 = vunpack.i.h.s16 %v251
    %v267 = vunpack.i.l.s16 %v259
    %v268 = vunpack.i.h.s16 %v259
    %v269 = vunpack.i.l.s16 %v261
    %v270 = vunpack.i.h.s16 %v261
    %v271 = vunpack.i.l.s16 %v244
    %v272 = vunpack.i.h.s16 %v244
    %v273 = vunpack.i.l.s16 %v258
    %v274 = vunpack.i.h.s16 %v258
    %v275 = vunpack.i.l.s16 %v260
    %v276 = vunpack.i.h.s16 %v260
    %v277 = vunpack.i.l.s16 %v262
    %v278 = vunpack.i.h.s16 %v262
    %v279 = vpack.i.b16 %v263, %v263
    %v280 = vpack.i.b16 %v264, %v264
    %v281 = vpack.i.b16 %v265, %v265
    %v282 = vpack.i.b16 %v266, %v266
    %v283 = vpack.i.b16 %v267, %v267
    %v284 = vpack.i.b16 %v268, %v268
    %v285 = vpack.i.b16 %v269, %v269
    %v286 = vpack.i.b16 %v270, %v270
    %v287 = vpack.i.b16 %v271, %v271
    %v288 = vpack.i.b16 %v272, %v272
    %v289 = vpack.i.b16 %v273, %v273
    %v290 = vpack.i.b16 %v274, %v274
    %v291 = vpack.i.b16 %v275, %v275
    %v292 = vpack.i.b16 %v276, %v276
    %v293 = vpack.i.b16 %v277, %v277
    %v294 = vpack.i.b16 %v278, %v278
    %v295 = vlaneseq
    %v296 = vshrl.u32 %v295, 7
    %v297 = vsub.s32 0, %v296
    %v298 = vrot.slane %v279, %v297
    %v299 = vlaneseq
    %v300 = vshrl.u32 %v299, 7
    %v301 = vsub.s32 0, %v300
    %v302 = vrot.slane %v280, %v301
    %v303 = vlaneseq
    %v304 = vshrl.u32 %v303, 7
    %v305 = vsub.s32 0, %v304
    %v306 = vrot.slane %v281, %v305
    %v307 = vlaneseq
    %v308 = vshrl.u32 %v307, 7
    %v309 = vsub.s32 0, %v308
    %v310 = vrot.slane %v282, %v309
    %v311 = vlaneseq
    %v312 = vshrl.u32 %v311, 7
    %v313 = vsub.s32 0, %v312
    %v314 = vrot.slane %v283, %v313
    %v315 = vlaneseq
    %v316 = vshrl.u32 %v315, 7
    %v317 = vsub.s32 0, %v316
    %v318 = vrot.slane %v284, %v317
    %v319 = vlaneseq
    %v320 = vshrl.u32 %v319, 7
    %v321 = vsub.s32 0, %v320
    %v322 = vrot.slane %v285, %v321
    %v323 = vlaneseq
    %v324 = vshrl.u32 %v323, 7
    %v325 = vsub.s32 0, %v324
    %v326 = vrot.slane %v286, %v325
    %v327 = vlaneseq
    %v328 = vshrl.u32 %v327, 7
    %v329 = vsub.s32 0, %v328
    %v330 = vrot.slane %v287, %v329
    %v331 = vlaneseq
    %v332 = vshrl.u32 %v331, 7
    %v333 = vsub.s32 0, %v332
    %v334 = vrot.slane %v288, %v333
    %v335 = vlaneseq
    %v336 = vshrl.u32 %v335, 7
    %v337 = vsub.s32 0, %v336
    %v338 = vrot.slane %v289, %v337
    %v339 = vlaneseq
    %v340 = vshrl.u32 %v339, 7
    %v341 = vsub.s32 0, %v340
    %v342 = vrot.slane %v290, %v341
    %v343 = vlaneseq
    %v344 = vshrl.u32 %v343, 7
    %v345 = vsub.s32 0, %v344
    %v346 = vrot.slane %v291, %v345
    %v347 = vlaneseq
    %v348 = vshrl.u32 %v347, 7
    %v349 = vsub.s32 0, %v348
    %v350 = vrot.slane %v292, %v349
    %v351 = vlaneseq
    %v352 = vshrl.u32 %v351, 7
    %v353 = vsub.s32 0, %v352
    %v354 = vrot.slane %v293, %v353
    %v355 = vlaneseq
    %v356 = vshrl.u32 %v355, 7
    %v357 = vsub.s32 0, %v356
    %v358 = vrot.slane %v294, %v357
    %v360 = vpack.i.b16 %v298, %v298
    %v362 = vlaneseq
    %v363 = vshrl.u32 %v362, 7
    %v364 = vsub.s32 0, %v363
    %v365 = vrot.slane %v360, %v364
    %v367 = vpack.i.b16 %v302, %v302
    %v369 = vlaneseq
    %v370 = vshrl.u32 %v369, 7
    %v371 = vsub.s32 0, %v370
    %v372 = vrot.slane %v367, %v371
    %v374 = vpack.i.b16 %v306, %v306
    %v376 = vlaneseq
    %v377 = vshrl.u32 %v376, 7
    %v378 = vsub.s32 0, %v377
    %v379 = vrot.slane %v374, %v378
    %v381 = vpack.i.b16 %v310, %v310
    %v383 = vlaneseq
    %v384 = vshrl.u32 %v383, 7
    %v385 = vsub.s32 0, %v384
    %v386 = vrot.slane %v381, %v385
    %v388 = vpack.i.b16 %v314, %v314
    %v390 = vlaneseq
    %v391 = vshrl.u32 %v390, 7
    %v392 = vsub.s32 0, %v391
    %v393 = vrot.slane %v388, %v392
    %v395 = vpack.i.b16 %v318, %v318
    %v397 = vlaneseq
    %v398 = vshrl.u32 %v397, 7
    %v399 = vsub.s32 0, %v398
    %v400 = vrot.slane %v395, %v399
    %v402 = vpack.i.b16 %v322, %v322
    %v404 = vlaneseq
    %v405 = vshrl.u32 %v404, 7
    %v406 = vsub.s32 0, %v405
    %v407 = vrot.slane %v402, %v406
    %v409 = vpack.i.b16 %v326, %v326
    %v411 = vlaneseq
    %v412 = vshrl.u32 %v411, 7
    %v413 = vsub.s32 0, %v412
    %v414 = vrot.slane %v409, %v413
    %v416 = vpack.i.b16 %v330, %v330
    %v418 = vlaneseq
    %v419 = vshrl.u32 %v418, 7
    %v420 = vsub.s32 0, %v419
    %v421 = vrot.slane %v416, %v420
    %v423 = vpack.i.b16 %v334, %v334
    %v425 = vlaneseq
    %v426 = vshrl.u32 %v425, 7
    %v427 = vsub.s32 0, %v426
    %v428 = vrot.slane %v423, %v427
    %v430 = vpack.i.b16 %v338, %v338
    %v432 = vlaneseq
    %v433 = vshrl.u32 %v432, 7
    %v434 = vsub.s32 0, %v433
    %v435 = vrot.slane %v430, %v434
    %v437 = vpack.i.b16 %v342, %v342
    %v439 = vlaneseq
    %v440 = vshrl.u32 %v439, 7
    %v441 = vsub.s32 0, %v440
    %v442 = vrot.slane %v437, %v441
    %v444 = vpack.i.b16 %v346, %v346
    %v446 = vlaneseq
    %v447 = vshrl.u32 %v446, 7
    %v448 = vsub.s32 0, %v447
    %v449 = vrot.slane %v444, %v448
    %v451 = vpack.i.b16 %v350, %v350
    %v453 = vlaneseq
    %v454 = vshrl.u32 %v453, 7
    %v455 = vsub.s32 0, %v454
    %v456 = vrot.slane %v451, %v455
    %v458 = vpack.i.b16 %v354, %v354
    %v460 = vlaneseq
    %v461 = vshrl.u32 %v460, 7
    %v462 = vsub.s32 0, %v461
    %v463 = vrot.slane %v458, %v462
    %v465 = vpack.i.b16 %v358, %v358
    %v467 = vlaneseq
    %v468 = vshrl.u32 %v467, 7
    %v469 = vsub.s32 0, %v468
    %v470 = vrot.slane %v465, %v469
    %v471 = vmul.bf16 %v365, %v212
    %v472 = vmul.bf16 %v372, %v212
    %v473 = vmul.bf16 %v379, %v212
    %v474 = vmul.bf16 %v386, %v212
    %v475 = vmul.bf16 %v393, %v212
    %v476 = vmul.bf16 %v400, %v212
    %v477 = vmul.bf16 %v407, %v212
    %v478 = vmul.bf16 %v414, %v212
    %v479 = vmul.bf16 %v421, %v212
    %v480 = vmul.bf16 %v428, %v212
    %v481 = vmul.bf16 %v435, %v212
    %v482 = vmul.bf16 %v442, %v212
    %v483 = vmul.bf16 %v449, %v212
    %v484 = vmul.bf16 %v456, %v212
    %v485 = vmul.bf16 %v463, %v212
    %v486 = vmul.bf16 %v470, %v212
    %v487 = vtanh.bf16.pop %v471
    %v488 = vtanh.bf16.pop %v472
    %v489 = vtanh.bf16.pop %v473
    %v490 = vtanh.bf16.pop %v474
    %v491 = vtanh.bf16.pop %v475
    %v492 = vtanh.bf16.pop %v476
    %v493 = vtanh.bf16.pop %v477
    %v494 = vtanh.bf16.pop %v478
    %v495 = vtanh.bf16.pop %v479
    %v496 = vtanh.bf16.pop %v480
    %v497 = vtanh.bf16.pop %v481
    %v498 = vtanh.bf16.pop %v482
    %v499 = vtanh.bf16.pop %v483
    %v500 = vtanh.bf16.pop %v484
    %v501 = vtanh.bf16.pop %v485
    %v502 = vtanh.bf16.pop %v486
    %v503 = vld [vmem:[#allocation8] sm:$0xf]
    %v504 = vld [vmem:[#allocation8 + $0x4] sm:$0xf]
    %v505 = vld [vmem:[#allocation8 + $0x8] sm:$0xf]
    %v506 = vld [vmem:[#allocation8 + $0xc] sm:$0xf]
    %v507 = vld [vmem:[#allocation8 + $0x10] sm:$0xf]
    %v508 = vld [vmem:[#allocation8 + $0x14] sm:$0xf]
    %v509 = vld [vmem:[#allocation8 + $0x18] sm:$0xf]
    %v510 = vld [vmem:[#allocation8 + $0x1c] sm:$0xf]
    %v511 = vld [vmem:[#allocation8 + $0x20] sm:$0xf]
    %v512 = vld [vmem:[#allocation8 + $0x24] sm:$0xf]
    %v513 = vld [vmem:[#allocation8 + $0x28] sm:$0xf]
    %v514 = vld [vmem:[#allocation8 + $0x2c] sm:$0xf]
    %v515 = vld [vmem:[#allocation8 + $0x30] sm:$0xf]
    %v516 = vld [vmem:[#allocation8 + $0x34] sm:$0xf]
    %v517 = vld [vmem:[#allocation8 + $0x38] sm:$0xf]
    %v518 = vld [vmem:[#allocation8 + $0x3c] sm:$0xf]
    %v519 = vld [vmem:[%s4] sm:$0x1]
    %v521 = vlaneseq
    %v522 = vshrl.u32 %v521, 7
    %v523 = vsub.s32 0, %v522
    %v524 = vrot.slane %v519, %v523
    %v542 = vcombine.low %v487, %v488
    %v543 = vcombine.low %v489, %v490
    %v545 = vunpack.c.l.s4 1983009808
    %v546 = vunpack.c.0.s8 %v545
    %v547 = vlaneseq
    %v548 = vshrl.u32 %v547, 7
    %v549 = vsub.s32 %v546, %v548
    %v550 = vrot.slane %v542, %v549
    %v552 = vunpack.c.l.s4 1983009808
    %v553 = vunpack.c.0.s8 %v552
    %v554 = vlaneseq
    %v555 = vshrl.u32 %v554, 7
    %v556 = vsub.s32 %v553, %v555
    %v557 = vrot.slane %v543, %v556
    %v558 = vcombine.low %v550, %v557
    %v559 = vcombine.low %v491, %v492
    %v560 = vcombine.low %v493, %v494
    %v562 = vunpack.c.l.s4 1983009808
    %v563 = vunpack.c.0.s8 %v562
    %v564 = vlaneseq
    %v565 = vshrl.u32 %v564, 7
    %v566 = vsub.s32 %v563, %v565
    %v567 = vrot.slane %v559, %v566
    %v569 = vunpack.c.l.s4 1983009808
    %v570 = vunpack.c.0.s8 %v569
    %v571 = vlaneseq
    %v572 = vshrl.u32 %v571, 7
    %v573 = vsub.s32 %v570, %v572
    %v574 = vrot.slane %v560, %v573
    %v575 = vcombine.low %v567, %v574
    %v576 = vcombine.low %v495, %v496
    %v577 = vcombine.low %v497, %v498
    %v579 = vunpack.c.l.s4 1983009808
    %v580 = vunpack.c.0.s8 %v579
    %v581 = vlaneseq
    %v582 = vshrl.u32 %v581, 7
    %v583 = vsub.s32 %v580, %v582
    %v584 = vrot.slane %v576, %v583
    %v586 = vunpack.c.l.s4 1983009808
    %v587 = vunpack.c.0.s8 %v586
    %v588 = vlaneseq
    %v589 = vshrl.u32 %v588, 7
    %v590 = vsub.s32 %v587, %v589
    %v591 = vrot.slane %v577, %v590
    %v592 = vcombine.low %v584, %v591
    %v593 = vcombine.low %v499, %v500
    %v594 = vcombine.low %v501, %v502
    %v596 = vunpack.c.l.s4 1983009808
    %v597 = vunpack.c.0.s8 %v596
    %v598 = vlaneseq
    %v599 = vshrl.u32 %v598, 7
    %v600 = vsub.s32 %v597, %v599
    %v601 = vrot.slane %v593, %v600
    %v603 = vunpack.c.l.s4 1983009808
    %v604 = vunpack.c.0.s8 %v603
    %v605 = vlaneseq
    %v606 = vshrl.u32 %v605, 7
    %v607 = vsub.s32 %v604, %v606
    %v608 = vrot.slane %v594, %v607
    %v609 = vcombine.low %v601, %v608
    %v630 = vunpack.c.l.b16 %v503
    %v631 = vunpack.c.l.b16 %v504
    %v632 = vunpack.c.l.b16 %v505
    %v633 = vunpack.c.l.b16 %v506
    %v634 = vunpack.c.l.b16 %v507
    %v635 = vunpack.c.l.b16 %v508
    %v636 = vunpack.c.l.b16 %v509
    %v637 = vunpack.c.l.b16 %v510
    %v638 = vunpack.c.l.b16 %v511
    %v639 = vunpack.c.l.b16 %v512
    %v640 = vunpack.c.l.b16 %v513
    %v641 = vunpack.c.l.b16 %v514
    %v642 = vunpack.c.l.b16 %v515
    %v643 = vunpack.c.l.b16 %v516
    %v644 = vunpack.c.l.b16 %v517
    %v645 = vunpack.c.l.b16 %v518
    %v646 = vpack.c.b16 %v631, %v630
    %v647 = vpack.c.b16 %v633, %v632
    %v648 = vpack.c.b16 %v635, %v634
    %v649 = vpack.c.b16 %v637, %v636
    %v650 = vpack.c.b16 %v639, %v638
    %v651 = vpack.c.b16 %v641, %v640
    %v652 = vpack.c.b16 %v643, %v642
    %v653 = vpack.c.b16 %v645, %v644
    %662 = vmatprep.subr.bf16.mxu0 0
    %663 = vmatpush1.bf16.msra.mxu0 %v653
    %664 = vmatprep.subr.bf16.mxu0 0
    %665 = vmatpush1.bf16.msra.mxu0 %v652
    %666 = vmatprep.subr.bf16.mxu0 0
    %667 = vmatpush1.bf16.msra.mxu0 %v651
    %668 = vmatprep.subr.bf16.mxu0 0
    %669 = vmatpush1.bf16.msra.mxu0 %v650
    %670 = vmatprep.subr.bf16.mxu0 0
    %671 = vmatpush1.bf16.msra.mxu0 %v649
    %672 = vmatprep.subr.bf16.mxu0 0
    %673 = vmatpush1.bf16.msra.mxu0 %v648
    %674 = vmatprep.subr.bf16.mxu0 0
    %675 = vmatpush1.bf16.msra.mxu0 %v647
    %676 = vmatprep.subr.bf16.mxu0 0
    %677 = vmatpush1.bf16.msra.mxu0 %v646
    %678 = vmatprep.subr.bf16.mxu0 0
    %679 = vmatpush2.bf16.msra.mxu0 0
    %680 = vmatprep.subr.bf16.mxu0 0
    %681 = vmatpush2.bf16.msra.mxu0 0
    %682 = vmatprep.subr.bf16.mxu0 0
    %683 = vmatpush2.bf16.msra.mxu0 0
    %684 = vmatprep.subr.bf16.mxu0 0
    %685 = vmatpush2.bf16.msra.mxu0 0
    %686 = vmatprep.subr.bf16.mxu0 0
    %687 = vmatpush2.bf16.msra.mxu0 0
    %688 = vmatprep.subr.bf16.mxu0 0
    %689 = vmatpush2.bf16.msra.mxu0 0
    %690 = vmatprep.subr.bf16.mxu0 0
    %691 = vmatpush2.bf16.msra.mxu0 0
    %692 = vmatprep.subr.bf16.mxu0 0
    %693 = vmatpush2.bf16.msra.mxu0 0
    %694 = vmatprep.mubr.bf16.mxu0 0
    %695 = vmatmul.mubr.bf16.gmra.mxu0 %v558
    %v696 = vpop.f32.mrf.mxu0
    %v697 = vadd.f32 %v524, %v696
    %v698 = vpop.f32.mrf.mxu0
    %v699 = vpop.f32.mrf.mxu0
    %v700 = vadd.f32 %v524, %v699
    %v701 = vpop.f32.mrf.mxu0
    %702 = vmatprep.mubr.bf16.mxu0 0
    %703 = vmatmul.mubr.bf16.gmra.mxu0 %v575
    %v704 = vpop.f32.mrf.mxu0
    %v705 = vadd.f32 %v524, %v704
    %v706 = vpop.f32.mrf.mxu0
    %v707 = vpop.f32.mrf.mxu0
    %v708 = vadd.f32 %v524, %v707
    %v709 = vpop.f32.mrf.mxu0
    %710 = vmatprep.mubr.bf16.mxu0 0
    %711 = vmatmul.mubr.bf16.gmra.mxu0 %v592
    %v712 = vpop.f32.mrf.mxu0
    %v713 = vadd.f32 %v524, %v712
    %v714 = vpop.f32.mrf.mxu0
    %v715 = vpop.f32.mrf.mxu0
    %v716 = vadd.f32 %v524, %v715
    %v717 = vpop.f32.mrf.mxu0
    %718 = vmatprep.mubr.bf16.mxu0 0
    %719 = vmatmul.mubr.bf16.gmra.mxu0 %v609
    %v720 = vpop.f32.mrf.mxu0
    %v721 = vadd.f32 %v524, %v720
    %v722 = vpop.f32.mrf.mxu0
    %v723 = vpop.f32.mrf.mxu0
    %v724 = vadd.f32 %v524, %v723
    %v725 = vpop.f32.mrf.mxu0
    %726 = vdwg.mxu0
    %v727 = vpack.c.bf16 %v700, %v697
    %v728 = vpack.c.bf16 %v708, %v705
    %v729 = vpack.c.bf16 %v716, %v713
    %v730 = vpack.c.bf16 %v724, %v721
    %v731 = vld [vmem:[#allocation10] sm:$0xf]
    %v732 = vld [vmem:[#allocation10 + $0x4] sm:$0xf]
    %v733 = vld [vmem:[#allocation10 + $0x8] sm:$0xf]
    %v734 = vld [vmem:[#allocation10 + $0xc] sm:$0xf]
    %v735 = vld [vmem:[#allocation10 + $0x10] sm:$0xf]
    %v736 = vld [vmem:[#allocation10 + $0x14] sm:$0xf]
    %v737 = vld [vmem:[#allocation10 + $0x18] sm:$0xf]
    %v738 = vld [vmem:[#allocation10 + $0x1c] sm:$0xf]
    %v739 = vld [vmem:[#allocation10 + $0x20] sm:$0xf]
    %v740 = vld [vmem:[#allocation10 + $0x24] sm:$0xf]
    %v741 = vld [vmem:[#allocation10 + $0x28] sm:$0xf]
    %v742 = vld [vmem:[#allocation10 + $0x2c] sm:$0xf]
    %v743 = vld [vmem:[#allocation10 + $0x30] sm:$0xf]
    %v744 = vld [vmem:[#allocation10 + $0x34] sm:$0xf]
    %v745 = vld [vmem:[#allocation10 + $0x38] sm:$0xf]
    %v746 = vld [vmem:[#allocation10 + $0x3c] sm:$0xf]
    %v747 = vld [vmem:[%s6] sm:$0x1]
    %v749 = vlaneseq
    %v750 = vshrl.u32 %v749, 7
    %v751 = vsub.s32 0, %v750
    %v752 = vrot.slane %v747, %v751
    %v770 = vunpack.c.l.b16 %v731
    %v771 = vunpack.c.l.b16 %v732
    %v772 = vunpack.c.l.b16 %v733
    %v773 = vunpack.c.l.b16 %v734
    %v774 = vunpack.c.l.b16 %v735
    %v775 = vunpack.c.l.b16 %v736
    %v776 = vunpack.c.l.b16 %v737
    %v777 = vunpack.c.l.b16 %v738
    %v778 = vunpack.c.l.b16 %v739
    %v779 = vunpack.c.l.b16 %v740
    %v780 = vunpack.c.l.b16 %v741
    %v781 = vunpack.c.l.b16 %v742
    %v782 = vunpack.c.l.b16 %v743
    %v783 = vunpack.c.l.b16 %v744
    %v784 = vunpack.c.l.b16 %v745
    %v785 = vunpack.c.l.b16 %v746
    %v786 = vpack.c.b16 %v771, %v770
    %v787 = vpack.c.b16 %v773, %v772
    %v788 = vpack.c.b16 %v775, %v774
    %v789 = vpack.c.b16 %v777, %v776
    %v790 = vpack.c.b16 %v779, %v778
    %v791 = vpack.c.b16 %v781, %v780
    %v792 = vpack.c.b16 %v783, %v782
    %v793 = vpack.c.b16 %v785, %v784
    %802 = vmatprep.subr.bf16.mxu0 0
    %803 = vmatpush1.bf16.msra.mxu0 %v793
    %804 = vmatprep.subr.bf16.mxu0 0
    %805 = vmatpush1.bf16.msra.mxu0 %v792
    %806 = vmatprep.subr.bf16.mxu0 0
    %807 = vmatpush1.bf16.msra.mxu0 %v791
    %808 = vmatprep.subr.bf16.mxu0 0
    %809 = vmatpush1.bf16.msra.mxu0 %v790
    %810 = vmatprep.subr.bf16.mxu0 0
    %811 = vmatpush1.bf16.msra.mxu0 %v789
    %812 = vmatprep.subr.bf16.mxu0 0
    %813 = vmatpush1.bf16.msra.mxu0 %v788
    %814 = vmatprep.subr.bf16.mxu0 0
    %815 = vmatpush1.bf16.msra.mxu0 %v787
    %816 = vmatprep.subr.bf16.mxu0 0
    %817 = vmatpush1.bf16.msra.mxu0 %v786
    %818 = vmatprep.subr.bf16.mxu0 0
    %819 = vmatpush2.bf16.msra.mxu0 0
    %820 = vmatprep.subr.bf16.mxu0 0
    %821 = vmatpush2.bf16.msra.mxu0 0
    %822 = vmatprep.subr.bf16.mxu0 0
    %823 = vmatpush2.bf16.msra.mxu0 0
    %824 = vmatprep.subr.bf16.mxu0 0
    %825 = vmatpush2.bf16.msra.mxu0 0
    %826 = vmatprep.subr.bf16.mxu0 0
    %827 = vmatpush2.bf16.msra.mxu0 0
    %828 = vmatprep.subr.bf16.mxu0 0
    %829 = vmatpush2.bf16.msra.mxu0 0
    %830 = vmatprep.subr.bf16.mxu0 0
    %831 = vmatpush2.bf16.msra.mxu0 0
    %832 = vmatprep.subr.bf16.mxu0 0
    %833 = vmatpush2.bf16.msra.mxu0 0
    %834 = vmatprep.mubr.bf16.mxu0 0
    %835 = vmatmul.mubr.bf16.gmra.mxu0 %v727
    %v836 = vpop.f32.mrf.mxu0
    %v837 = vadd.f32 %v752, %v836
    %v838 = vpop.f32.mrf.mxu0
    %v839 = vpop.f32.mrf.mxu0
    %v840 = vadd.f32 %v752, %v839
    %v841 = vpop.f32.mrf.mxu0
    %842 = vmatprep.mubr.bf16.mxu0 0
    %843 = vmatmul.mubr.bf16.gmra.mxu0 %v728
    %v844 = vpop.f32.mrf.mxu0
    %v845 = vadd.f32 %v752, %v844
    %v846 = vpop.f32.mrf.mxu0
    %v847 = vpop.f32.mrf.mxu0
    %v848 = vadd.f32 %v752, %v847
    %v849 = vpop.f32.mrf.mxu0
    %850 = vmatprep.mubr.bf16.mxu0 0
    %851 = vmatmul.mubr.bf16.gmra.mxu0 %v729
    %v852 = vpop.f32.mrf.mxu0
    %v853 = vadd.f32 %v752, %v852
    %v854 = vpop.f32.mrf.mxu0
    %v855 = vpop.f32.mrf.mxu0
    %v856 = vadd.f32 %v752, %v855
    %v857 = vpop.f32.mrf.mxu0
    %858 = vmatprep.mubr.bf16.mxu0 0
    %859 = vmatmul.mubr.bf16.gmra.mxu0 %v730
    %v860 = vpop.f32.mrf.mxu0
    %v861 = vadd.f32 %v752, %v860
    %v862 = vpop.f32.mrf.mxu0
    %v863 = vpop.f32.mrf.mxu0
    %v864 = vadd.f32 %v752, %v863
    %v865 = vpop.f32.mrf.mxu0
    %866 = vdwg.mxu0
    %v875 = vcombine.high %v837, %v837
    %v876 = vcombine.high %v840, %v840
    %v877 = vcombine.high %v845, %v845
    %v878 = vcombine.high %v848, %v848
    %v879 = vcombine.high %v853, %v853
    %v880 = vcombine.high %v856, %v856
    %v881 = vcombine.high %v861, %v861
    %v882 = vcombine.high %v864, %v864
    %vm891 = vcmask 1043456
    %v892 = vsel %vm891, %v837, -inf
    %v893 = vsel %vm891, %v875, -inf
    %v894 = vsel %vm891, %v840, -inf
    %v895 = vmax.f32 %v892, %v894
    %v896 = vsel %vm891, %v876, -inf
    %v897 = vmax.f32 %v893, %v896
    %v898 = vsel %vm891, %v845, -inf
    %v899 = vmax.f32 %v895, %v898
    %v900 = vsel %vm891, %v877, -inf
    %v901 = vmax.f32 %v897, %v900
    %v902 = vsel %vm891, %v848, -inf
    %v903 = vmax.f32 %v899, %v902
    %v904 = vsel %vm891, %v878, -inf
    %v905 = vmax.f32 %v901, %v904
    %v906 = vmax.f32 %v903, %v905
    %v907 = vsel %vm891, %v853, -inf
    %v908 = vsel %vm891, %v879, -inf
    %v909 = vsel %vm891, %v856, -inf
    %v910 = vmax.f32 %v907, %v909
    %v911 = vsel %vm891, %v880, -inf
    %v912 = vmax.f32 %v908, %v911
    %v913 = vsel %vm891, %v861, -inf
    %v914 = vmax.f32 %v910, %v913
    %v915 = vsel %vm891, %v881, -inf
    %v916 = vmax.f32 %v912, %v915
    %v917 = vsel %vm891, %v864, -inf
    %v918 = vmax.f32 %v914, %v917
    %v919 = vsel %vm891, %v882, -inf
    %v920 = vmax.f32 %v916, %v919
    %v921 = vmax.f32 %v918, %v920
    %v922 = vsub.f32 %v837, %v906
    %v923 = vsub.f32 %v875, %v906
    %v924 = vsub.f32 %v840, %v906
    %v925 = vsub.f32 %v876, %v906
    %v926 = vsub.f32 %v845, %v906
    %v927 = vsub.f32 %v877, %v906
    %v928 = vsub.f32 %v848, %v906
    %v929 = vsub.f32 %v878, %v906
    %v930 = vsub.f32 %v853, %v921
    %v931 = vsub.f32 %v879, %v921
    %v932 = vsub.f32 %v856, %v921
    %v933 = vsub.f32 %v880, %v921
    %v934 = vsub.f32 %v861, %v921
    %v935 = vsub.f32 %v881, %v921
    %v936 = vsub.f32 %v864, %v921
    %v937 = vsub.f32 %v882, %v921
    %v938 = vmul.f32 %v922, 1.442695
    %v939 = vpow.pop %v938
    %v940 = vmul.f32 %v923, 1.442695
    %v941 = vpow.pop %v940
    %v942 = vmul.f32 %v924, 1.442695
    %v943 = vpow.pop %v942
    %v944 = vmul.f32 %v925, 1.442695
    %v945 = vpow.pop %v944
    %v946 = vmul.f32 %v926, 1.442695
    %v947 = vpow.pop %v946
    %v948 = vmul.f32 %v927, 1.442695
    %v949 = vpow.pop %v948
    %v950 = vmul.f32 %v928, 1.442695
    %v951 = vpow.pop %v950
    %v952 = vmul.f32 %v929, 1.442695
    %v953 = vpow.pop %v952
    %v954 = vmul.f32 %v930, 1.442695
    %v955 = vpow.pop %v954
    %v956 = vmul.f32 %v931, 1.442695
    %v957 = vpow.pop %v956
    %v958 = vmul.f32 %v932, 1.442695
    %v959 = vpow.pop %v958
    %v960 = vmul.f32 %v933, 1.442695
    %v961 = vpow.pop %v960
    %v962 = vmul.f32 %v934, 1.442695
    %v963 = vpow.pop %v962
    %v964 = vmul.f32 %v935, 1.442695
    %v965 = vpow.pop %v964
    %v966 = vmul.f32 %v936, 1.442695
    %v967 = vpow.pop %v966
    %v968 = vmul.f32 %v937, 1.442695
    %v969 = vpow.pop %v968
    %v970 = vsel %vm891, %v939, 0.0
    %v971 = vsel %vm891, %v941, 0.0
    %v972 = vadd.f32 %v970, %v971
    %v973 = vsel %vm891, %v943, 0.0
    %v974 = vadd.f32 %v972, %v973
    %v975 = vsel %vm891, %v945, 0.0
    %v976 = vadd.f32 %v974, %v975
    %v977 = vsel %vm891, %v947, 0.0
    %v978 = vadd.f32 %v976, %v977
    %v979 = vsel %vm891, %v949, 0.0
    %v980 = vadd.f32 %v978, %v979
    %v981 = vsel %vm891, %v951, 0.0
    %v982 = vadd.f32 %v980, %v981
    %v983 = vsel %vm891, %v953, 0.0
    %v984 = vadd.f32 %v982, %v983
    %v985 = vsel %vm891, %v955, 0.0
    %v986 = vsel %vm891, %v957, 0.0
    %v987 = vadd.f32 %v985, %v986
    %v988 = vsel %vm891, %v959, 0.0
    %v989 = vadd.f32 %v987, %v988
    %v990 = vsel %vm891, %v961, 0.0
    %v991 = vadd.f32 %v989, %v990
    %v992 = vsel %vm891, %v963, 0.0
    %v993 = vadd.f32 %v991, %v992
    %v994 = vsel %vm891, %v965, 0.0
    %v995 = vadd.f32 %v993, %v994
    %v996 = vsel %vm891, %v967, 0.0
    %v997 = vadd.f32 %v995, %v996
    %v998 = vsel %vm891, %v969, 0.0
    %v999 = vadd.f32 %v997, %v998
    %v1000 = vrcp.pop %v984
    %v1001 = vrcp.pop %v999
    %v1002 = vmul.f32 %v939, %v1000
    %v1003 = vmul.f32 %v941, %v1000
    %v1004 = vmul.f32 %v943, %v1000
    %v1005 = vmul.f32 %v945, %v1000
    %v1006 = vmul.f32 %v947, %v1000
    %v1007 = vmul.f32 %v949, %v1000
    %v1008 = vmul.f32 %v951, %v1000
    %v1009 = vmul.f32 %v953, %v1000
    %v1010 = vmul.f32 %v955, %v1001
    %v1011 = vmul.f32 %v957, %v1001
    %v1012 = vmul.f32 %v959, %v1001
    %v1013 = vmul.f32 %v961, %v1001
    %v1014 = vmul.f32 %v963, %v1001
    %v1015 = vmul.f32 %v965, %v1001
    %v1016 = vmul.f32 %v967, %v1001
    %v1017 = vmul.f32 %v969, %v1001
    %v1026 = vcombine.high %v697, %v697
    %v1027 = vcombine.high %v700, %v700
    %v1028 = vcombine.high %v705, %v705
    %v1029 = vcombine.high %v708, %v708
    %v1030 = vcombine.high %v713, %v713
    %v1031 = vcombine.high %v716, %v716
    %v1032 = vcombine.high %v721, %v721
    %v1033 = vcombine.high %v724, %v724
    %v1042 = vmul.f32 %v697, %v1002
    %v1043 = vmul.f32 %v1026, %v1003
    %v1044 = vmul.f32 %v700, %v1004
    %v1045 = vmul.f32 %v1027, %v1005
    %v1046 = vmul.f32 %v705, %v1006
    %v1047 = vmul.f32 %v1028, %v1007
    %v1048 = vmul.f32 %v708, %v1008
    %v1049 = vmul.f32 %v1029, %v1009
    %v1050 = vmul.f32 %v713, %v1010
    %v1051 = vmul.f32 %v1030, %v1011
    %v1052 = vmul.f32 %v716, %v1012
    %v1053 = vmul.f32 %v1031, %v1013
    %v1054 = vmul.f32 %v721, %v1014
    %v1055 = vmul.f32 %v1032, %v1015
    %v1056 = vmul.f32 %v724, %v1016
    %v1057 = vmul.f32 %v1033, %v1017
    %v1058 = vsel %vm891, %v1042, 0.0
    %v1059 = vsel %vm891, %v1043, 0.0
    %v1060 = vadd.f32 %v1058, %v1059
    %v1061 = vsel %vm891, %v1044, 0.0
    %v1062 = vadd.f32 %v1060, %v1061
    %v1063 = vsel %vm891, %v1045, 0.0
    %v1064 = vadd.f32 %v1062, %v1063
    %v1065 = vsel %vm891, %v1046, 0.0
    %v1066 = vadd.f32 %v1064, %v1065
    %v1067 = vsel %vm891, %v1047, 0.0
    %v1068 = vadd.f32 %v1066, %v1067
    %v1069 = vsel %vm891, %v1048, 0.0
    %v1070 = vadd.f32 %v1068, %v1069
    %v1071 = vsel %vm891, %v1049, 0.0
    %v1072 = vadd.f32 %v1070, %v1071
    %v1073 = vsel %vm891, %v1050, 0.0
    %v1074 = vsel %vm891, %v1051, 0.0
    %v1075 = vadd.f32 %v1073, %v1074
    %v1076 = vsel %vm891, %v1052, 0.0
    %v1077 = vadd.f32 %v1075, %v1076
    %v1078 = vsel %vm891, %v1053, 0.0
    %v1079 = vadd.f32 %v1077, %v1078
    %v1080 = vsel %vm891, %v1054, 0.0
    %v1081 = vadd.f32 %v1079, %v1080
    %v1082 = vsel %vm891, %v1055, 0.0
    %v1083 = vadd.f32 %v1081, %v1082
    %v1084 = vsel %vm891, %v1056, 0.0
    %v1085 = vadd.f32 %v1083, %v1084
    %v1086 = vsel %vm891, %v1057, 0.0
    %v1087 = vadd.f32 %v1085, %v1086
    %1088 = vst [vmem:[#allocation11] sm:$0xf] %v1072
    %1089 = vst [vmem:[#allocation11 + $0x4] sm:$0xf] %v1087
    %1090 = vst [vmem:[#allocation12] sm:$0xf] %v1002
    %1091 = vst [vmem:[#allocation12 + $0x4] sm:$0xf] %v1003
    %1092 = vst [vmem:[#allocation12 + $0x8] sm:$0xf] %v1004
    %1093 = vst [vmem:[#allocation12 + $0xc] sm:$0xf] %v1005
    %1094 = vst [vmem:[#allocation12 + $0x10] sm:$0xf] %v1006
    %1095 = vst [vmem:[#allocation12 + $0x14] sm:$0xf] %v1007
    %1096 = vst [vmem:[#allocation12 + $0x18] sm:$0xf] %v1008
    %1097 = vst [vmem:[#allocation12 + $0x1c] sm:$0xf] %v1009
    %1098 = vst [vmem:[#allocation12 + $0x20] sm:$0xf] %v1010
    %1099 = vst [vmem:[#allocation12 + $0x24] sm:$0xf] %v1011
    %1100 = vst [vmem:[#allocation12 + $0x28] sm:$0xf] %v1012
    %1101 = vst [vmem:[#allocation12 + $0x2c] sm:$0xf] %v1013
    %1102 = vst [vmem:[#allocation12 + $0x30] sm:$0xf] %v1014
    %1103 = vst [vmem:[#allocation12 + $0x34] sm:$0xf] %v1015
    %1104 = vst [vmem:[#allocation12 + $0x38] sm:$0xf] %v1016
    %1105 = vst [vmem:[#allocation12 + $0x3c] sm:$0xf] %v1017
    // Predicated region
    $region50: #{tpu_custom_call.1} parent=1 // pred_check
      _
    $region51: #{tpu_custom_call.1} parent=1 // pred_check_branch
      %1107 = sbr.rel (0) target = $region53
    $region52: #{tpu_custom_call.1} parent=1 // pred_region
      %s1109 = ssub.s32 128, 128
      %1110 = vsyncadd [#allocation4], %s1109
      %s1111 = sshll.u32 [#allocation11], 4
      %s1112 = int_to_ptr.vmem [resolvable:$true] %s1111
      %1117 = dma.vmem_to_hbm [thread:$0]  %s1112, 128, %s7, [#allocation4], 64, 64, 4
    $region53: #{tpu_custom_call.1} parent=1 // pred_fallthru
      _
    // Predicated region
    $region54: #{tpu_custom_call.1} parent=1 // pred_check
      _
    $region55: #{tpu_custom_call.1} parent=1 // pred_check_branch
      %1119 = sbr.rel (0) target = $region57
    $region56: #{tpu_custom_call.1} parent=1 // pred_region
      %s1121 = ssub.s32 1024, 1024
      %1122 = vsyncadd [#allocation13], %s1121
      %s1123 = sshll.u32 [#allocation12], 4
      %s1124 = int_to_ptr.vmem [resolvable:$true] %s1123
      %1129 = dma.vmem_to_hbm [thread:$0]  %s1124, 1024, %s8, [#allocation13], 64, 64, 4
    $region57: #{tpu_custom_call.1} parent=1 // pred_fallthru
      _
    // Predicated region
    $region58: #{tpu_custom_call.1} parent=1 // pred_check
      _
    $region59: #{tpu_custom_call.1} parent=1 // pred_check_branch
      %1131 = sbr.rel (0) target = $region61
    $region60: #{tpu_custom_call.1} parent=1 // pred_region
      %1132 = dma.done [#allocation4], 128
    $region61: #{tpu_custom_call.1} parent=1 // pred_fallthru
      _
    // Predicated region
    $region62: #{tpu_custom_call.1} parent=1 // pred_check
      _
    $region63: #{tpu_custom_call.1} parent=1 // pred_check_branch
      %1134 = sbr.rel (0) target = $region65
    $region64: #{tpu_custom_call.1} parent=1 // pred_region
      %1135 = dma.done [#allocation13], 1024
    $region65: #{tpu_custom_call.1} parent=1 // pred_fallthru
      _
    %1136 = vsyncpa [#allocation3], 1
    %1137 = vsyncpa [#allocation6], 1
    %1138 = vsyncpa [#allocation9], 1
    %1139 = vsyncpa [#allocation4], 1
    %1140 = vsyncpa [#allocation13], 1

</llo_original>
